<compile_context>
chip_gen: v5e
topology: v5e:2x2
jax: 0.10.0
libtpu: 0.0.40
codegen_flags: <defaults>
</compile_context>

<pallas_src>
import functools

import jax
import jax.numpy as jnp
from jax.experimental import pallas as pl
from jax.experimental.pallas import tpu as pltpu


def _ffn_kernel(x_ref, w1_ref, b1_ref, w2_ref, b2_ref, g_ref, beta_ref, o_ref, *, eps):
    # Keep matmul operands in their native dtype (bf16 inputs hit the fast MXU path);
    # accumulate in f32.
    x = x_ref[...]                                                   # (TILE_T, d_hid)

    # w_1: project up + ReLU
    h = jnp.dot(x, w1_ref[...], preferred_element_type=jnp.float32)
    h = h + b1_ref[...].astype(jnp.float32)
    h = jnp.maximum(h, 0.0)                                          # (TILE_T, d_ff)
    # relu_dropout (FeatureDropout): identity in eval mode.

    # w_2: project back down
    out = jnp.dot(h.astype(w2_ref.dtype), w2_ref[...],
                  preferred_element_type=jnp.float32)
    out = out + b2_ref[...].astype(jnp.float32)
    # residual_dropout: identity in eval mode.

    # Residual add (f32 epilogue).
    z = out + x.astype(jnp.float32)                                  # (TILE_T, d_hid)

    # LayerNormalization: torch.std is unbiased (divide by N-1); eps added to std.
    d = z.shape[-1]
    mu = jnp.mean(z, axis=-1, keepdims=True)
    diff = z - mu
    var_unbiased = jnp.sum(diff * diff, axis=-1, keepdims=True) * (1.0 / (d - 1))
    sigma = jnp.sqrt(var_unbiased)
    inv = pl.reciprocal(sigma + eps)          # one reciprocal per row, broadcast-mul
    ln = diff * inv
    ln = ln * g_ref[...].astype(jnp.float32) + beta_ref[...].astype(jnp.float32)

    o_ref[...] = ln.astype(o_ref.dtype)


def positionwise_feed_forward(x, w1, b1, w2, b2, gamma, beta, *, eps=1e-3, tile_t=256):
    """x: (T, d_hid); w1: (d_hid, d_ff); w2: (d_ff, d_hid); biases/gamma/beta 1-D."""
    T, d_hid = x.shape
    d_ff = w1.shape[1]

    b1 = b1.reshape(1, d_ff)
    b2 = b2.reshape(1, d_hid)
    gamma = gamma.reshape(1, d_hid)
    beta = beta.reshape(1, d_hid)

    # Token tiling: TILE_T must be a multiple of 8 sublanes; pad T with zero rows
    # (LayerNorm is row-local, so padded rows are harmless and sliced off below).
    tile_t = max(8, min(tile_t, ((T + 7) // 8) * 8))
    n_tiles = pl.cdiv(T, tile_t)
    t_pad = n_tiles * tile_t
    x_in = jnp.pad(x, ((0, t_pad - T), (0, 0))) if t_pad != T else x

    # Advisory cost hint for the surrounding XLA schedule.
    flops = 4 * t_pad * d_hid * d_ff
    bytes_accessed = (
        x_in.size * x_in.dtype.itemsize
        + (w1.size + b1.size) * w1.dtype.itemsize
        + (w2.size + b2.size) * w2.dtype.itemsize
        + (gamma.size + beta.size) * gamma.dtype.itemsize
        + t_pad * d_hid * x.dtype.itemsize
    )
    cost = pl.CostEstimate(flops=flops, transcendentals=2 * t_pad,
                           bytes_accessed=bytes_accessed)

    # Weights / biases: constant block index -> resident in VMEM across the grid.
    resident = lambda shp: pl.BlockSpec(shp, lambda i: (0, 0))

    out = pl.pallas_call(
        functools.partial(_ffn_kernel, eps=eps),
        out_shape=jax.ShapeDtypeStruct((t_pad, d_hid), x.dtype),
        grid_spec=pltpu.PrefetchScalarGridSpec(
            num_scalar_prefetch=0,
            grid=(n_tiles,),
            in_specs=[
                pl.BlockSpec((tile_t, d_hid), lambda i: (i, 0)),   # x (pipelined)
                resident((d_hid, d_ff)),                           # w1
                resident((1, d_ff)),                               # b1
                resident((d_ff, d_hid)),                           # w2
                resident((1, d_hid)),                              # b2
                resident((1, d_hid)),                              # layer_norm a_2
                resident((1, d_hid)),                              # layer_norm b_2
            ],
            out_specs=pl.BlockSpec((tile_t, d_hid), lambda i: (i, 0)),
        ),
        compiler_params=pltpu.CompilerParams(
            dimension_semantics=("parallel",),          # token tiles are independent
            vmem_limit_bytes=32 * 1024 * 1024,          # fits v7x's 64 MiB physical
        ),
        cost_estimate=cost,
    )(x_in, w1, b1, w2, b2, gamma, beta)

    return out[:T] if t_pad != T else out


def reference_jax(x, w1, b1, w2, b2, gamma, beta, eps=1e-3):
    hp = jax.lax.Precision.HIGHEST
    h = jnp.maximum(jnp.dot(x, w1, precision=hp) + b1, 0.0)
    out = jnp.dot(h, w2, precision=hp) + b2
    z = out + x
    d = z.shape[-1]
    mu = jnp.mean(z, axis=-1, keepdims=True)
    var = jnp.sum((z - mu) ** 2, axis=-1, keepdims=True) / (d - 1)
    sigma = jnp.sqrt(var)
    return (z - mu) / (sigma + eps) * gamma + beta


if __name__ == "__main__":
    key = jax.random.PRNGKey(0)
    # Small but lane-aligned shapes: d_hid multiple of 128 keeps output stores
    # lane-dense; T=200 exercises the padding path; tile_t=128 gives a 2-step grid.
    T, d_hid, d_ff = 200, 128, 256

    kx, k1, kb1, k2, kb2 = jax.random.split(key, 5)
    x = jax.random.normal(kx, (T, d_hid), dtype=jnp.float32)

    # Deterministic parameter init (PyTorch-Linear-style uniform bounds).
    lim1 = 1.0 / (d_hid ** 0.5)
    lim2 = 1.0 / (d_ff ** 0.5)
    w1 = jax.random.uniform(k1, (d_hid, d_ff), jnp.float32, -lim1, lim1)
    b1 = jax.random.uniform(kb1, (d_ff,), jnp.float32, -lim1, lim1)
    w2 = jax.random.uniform(k2, (d_ff, d_hid), jnp.float32, -lim2, lim2)
    b2 = jax.random.uniform(kb2, (d_hid,), jnp.float32, -lim2, lim2)
    gamma = jnp.ones((d_hid,), jnp.float32)    # LayerNormalization a_2
    beta = jnp.zeros((d_hid,), jnp.float32)    # LayerNormalization b_2

    out = positionwise_feed_forward(x, w1, b1, w2, b2, gamma, beta, tile_t=128)
    out = jax.block_until_ready(out)

    ref = reference_jax(x, w1, b1, w2, b2, gamma, beta)
    assert out.shape == (T, d_hid)
    # Tolerance allows for MXU vs XLA f32 matmul pass differences.
    assert jnp.allclose(out, ref, atol=1e-3, rtol=1e-3), "mismatch vs JAX reference"

    print("KERNEL_OK")
</pallas_src>

<mosaic_0001>
module attributes {stable_mosaic.version = 11 : i64} {
  func.func @_ffn_kernel(%arg0: i32, %arg1: memref<128x128xf32, #tpu.memory_space<vmem>>, %arg2: memref<128x256xf32, #tpu.memory_space<vmem>>, %arg3: memref<1x256xf32, #tpu.memory_space<vmem>>, %arg4: memref<256x128xf32, #tpu.memory_space<vmem>>, %arg5: memref<1x128xf32, #tpu.memory_space<vmem>>, %arg6: memref<1x128xf32, #tpu.memory_space<vmem>>, %arg7: memref<1x128xf32, #tpu.memory_space<vmem>>, %arg8: memref<128x128xf32, #tpu.memory_space<vmem>>) attributes {dimension_semantics = [#tpu.dimension_semantics<parallel>], iteration_bounds = array<i64: 2>, scalar_prefetch = 0 : i64, scratch_operands = 0 : i64, tpu.core_type = #tpu.core_type<tc>, window_params = [{transform_indices = @transform_0, window_bounds = array<i64: 128, 128>}, {pipeline_mode = #tpu.pipeline_mode<synchronous>, transform_indices = @transform_1, window_bounds = array<i64: 128, 256>}, {pipeline_mode = #tpu.pipeline_mode<synchronous>, transform_indices = @transform_2, window_bounds = array<i64: 1, 256>}, {pipeline_mode = #tpu.pipeline_mode<synchronous>, transform_indices = @transform_3, window_bounds = array<i64: 256, 128>}, {pipeline_mode = #tpu.pipeline_mode<synchronous>, transform_indices = @transform_4, window_bounds = array<i64: 1, 128>}, {pipeline_mode = #tpu.pipeline_mode<synchronous>, transform_indices = @transform_5, window_bounds = array<i64: 1, 128>}, {pipeline_mode = #tpu.pipeline_mode<synchronous>, transform_indices = @transform_6, window_bounds = array<i64: 1, 128>}, {transform_indices = @transform_7, window_bounds = array<i64: 128, 128>}]} {
    %c0 = arith.constant 0 : index
    %c0_0 = arith.constant 0 : index
    %0 = vector.load %arg1[%c0, %c0_0] : memref<128x128xf32, #tpu.memory_space<vmem>>, vector<128x128xf32>
    %c0_1 = arith.constant 0 : index
    %c0_2 = arith.constant 0 : index
    %1 = vector.load %arg2[%c0_1, %c0_2] : memref<128x256xf32, #tpu.memory_space<vmem>>, vector<128x256xf32>
    %cst = arith.constant dense<0.000000e+00> : vector<128x256xf32>
    %2 = tpu.matmul %0, %1, %cst {dimension_numbers = #tpu.dot_dimension_numbers<[1], [0], [0], [1], [0, 0, 1, 1], [], []>} : vector<128x128xf32>, vector<128x256xf32>, vector<128x256xf32> -> vector<128x256xf32>
    %c0_3 = arith.constant 0 : index
    %c0_4 = arith.constant 0 : index
    %3 = vector.load %arg3[%c0_3, %c0_4] : memref<1x256xf32, #tpu.memory_space<vmem>>, vector<1x256xf32>
    %4 = vector.broadcast %3 : vector<1x256xf32> to vector<128x256xf32>
    %5 = arith.addf %2, %4 : vector<128x256xf32>
    %cst_5 = arith.constant 0.000000e+00 : f32
    %6 = vector.broadcast %cst_5 : f32 to vector<128x256xf32>
    %7 = arith.maximumf %5, %6 : vector<128x256xf32>
    %c0_6 = arith.constant 0 : index
    %c0_7 = arith.constant 0 : index
    %8 = vector.load %arg4[%c0_6, %c0_7] : memref<256x128xf32, #tpu.memory_space<vmem>>, vector<256x128xf32>
    %cst_8 = arith.constant dense<0.000000e+00> : vector<128x128xf32>
    %9 = tpu.matmul %7, %8, %cst_8 {dimension_numbers = #tpu.dot_dimension_numbers<[1], [0], [0], [1], [0, 0, 1, 1], [], []>} : vector<128x256xf32>, vector<256x128xf32>, vector<128x128xf32> -> vector<128x128xf32>
    %c0_9 = arith.constant 0 : index
    %c0_10 = arith.constant 0 : index
    %10 = vector.load %arg5[%c0_9, %c0_10] : memref<1x128xf32, #tpu.memory_space<vmem>>, vector<1x128xf32>
    %11 = vector.broadcast %10 : vector<1x128xf32> to vector<128x128xf32>
    %12 = arith.addf %9, %11 : vector<128x128xf32>
    %13 = arith.addf %12, %0 : vector<128x128xf32>
    %cst_11 = arith.constant dense<0.000000e+00> : vector<128xf32>
    %14 = vector.multi_reduction <add>, %13, %cst_11 [1] : vector<128x128xf32> to vector<128xf32>
    %15 = vector.shape_cast %14 : vector<128xf32> to vector<128x1xf32>
    %cst_12 = arith.constant 1.280000e+02 : f32
    %16 = vector.broadcast %cst_12 : f32 to vector<128x1xf32>
    %17 = arith.divf %15, %16 : vector<128x1xf32>
    %18 = vector.broadcast %17 : vector<128x1xf32> to vector<128x128xf32>
    %19 = arith.subf %13, %18 : vector<128x128xf32>
    %20 = arith.mulf %19, %19 : vector<128x128xf32>
    %cst_13 = arith.constant dense<0.000000e+00> : vector<128xf32>
    %21 = vector.multi_reduction <add>, %20, %cst_13 [1] : vector<128x128xf32> to vector<128xf32>
    %22 = vector.shape_cast %21 : vector<128xf32> to vector<128x1xf32>
    %cst_14 = arith.constant 0.00787401571 : f32
    %23 = vector.broadcast %cst_14 : f32 to vector<128x1xf32>
    %24 = arith.mulf %22, %23 : vector<128x1xf32>
    %25 = math.sqrt %24 : vector<128x1xf32>
    %cst_15 = arith.constant 1.000000e-03 : f32
    %26 = vector.broadcast %cst_15 : f32 to vector<128x1xf32>
    %27 = arith.addf %25, %26 : vector<128x1xf32>
    %28 = tpu.reciprocal %27 : vector<128x1xf32> -> vector<128x1xf32>
    %29 = vector.broadcast %28 : vector<128x1xf32> to vector<128x128xf32>
    %30 = arith.mulf %19, %29 : vector<128x128xf32>
    %c0_16 = arith.constant 0 : index
    %c0_17 = arith.constant 0 : index
    %31 = vector.load %arg6[%c0_16, %c0_17] : memref<1x128xf32, #tpu.memory_space<vmem>>, vector<1x128xf32>
    %32 = vector.broadcast %31 : vector<1x128xf32> to vector<128x128xf32>
    %33 = arith.mulf %30, %32 : vector<128x128xf32>
    %c0_18 = arith.constant 0 : index
    %c0_19 = arith.constant 0 : index
    %34 = vector.load %arg7[%c0_18, %c0_19] : memref<1x128xf32, #tpu.memory_space<vmem>>, vector<1x128xf32>
    %35 = vector.broadcast %34 : vector<1x128xf32> to vector<128x128xf32>
    %36 = arith.addf %33, %35 : vector<128x128xf32>
    %c0_20 = arith.constant 0 : index
    %c0_21 = arith.constant 0 : index
    %37 = vector.load %arg8[%c0_20, %c0_21] : memref<128x128xf32, #tpu.memory_space<vmem>>, vector<128x128xf32>
    tpu.vector_store %arg8[%c0_20, %c0_21], %36 {strides = array<i32>} : memref<128x128xf32, #tpu.memory_space<vmem>>, vector<128x128xf32>,
    return
  }
  func.func @transform_0(%arg0: i32) -> (i32, i32) {
    %c0_i32 = arith.constant 0 : i32
    %c0_i32_0 = arith.constant 0 : i32
    return %arg0, %c0_i32 : i32, i32
  }
  func.func @transform_1(%arg0: i32) -> (i32, i32) {
    %c0_i32 = arith.constant 0 : i32
    %c0_i32_0 = arith.constant 0 : i32
    %c0_i32_1 = arith.constant 0 : i32
    return %c0_i32, %c0_i32_0 : i32, i32
  }
  func.func @transform_2(%arg0: i32) -> (i32, i32) {
    %c0_i32 = arith.constant 0 : i32
    %c0_i32_0 = arith.constant 0 : i32
    %c0_i32_1 = arith.constant 0 : i32
    return %c0_i32, %c0_i32_0 : i32, i32
  }
  func.func @transform_3(%arg0: i32) -> (i32, i32) {
    %c0_i32 = arith.constant 0 : i32
    %c0_i32_0 = arith.constant 0 : i32
    %c0_i32_1 = arith.constant 0 : i32
    return %c0_i32, %c0_i32_0 : i32, i32
  }
  func.func @transform_4(%arg0: i32) -> (i32, i32) {
    %c0_i32 = arith.constant 0 : i32
    %c0_i32_0 = arith.constant 0 : i32
    %c0_i32_1 = arith.constant 0 : i32
    return %c0_i32, %c0_i32_0 : i32, i32
  }
  func.func @transform_5(%arg0: i32) -> (i32, i32) {
    %c0_i32 = arith.constant 0 : i32
    %c0_i32_0 = arith.constant 0 : i32
    %c0_i32_1 = arith.constant 0 : i32
    return %c0_i32, %c0_i32_0 : i32, i32
  }
  func.func @transform_6(%arg0: i32) -> (i32, i32) {
    %c0_i32 = arith.constant 0 : i32
    %c0_i32_0 = arith.constant 0 : i32
    %c0_i32_1 = arith.constant 0 : i32
    return %c0_i32, %c0_i32_0 : i32, i32
  }
  func.func @transform_7(%arg0: i32) -> (i32, i32) {
    %c0_i32 = arith.constant 0 : i32
    %c0_i32_0 = arith.constant 0 : i32
    return %arg0, %c0_i32 : i32, i32
  }
}

</mosaic_0001>

<llo_original>
// kernel: tpu_custom_call.1
$region0: #{tpu_custom_call.1}
  #allocation0 [shape = 'u32[]', space=smem, size = 0x4, offset = 0x4, fixed_abs, tag = 'smem constant byte address 0x4 - core index']
  #allocation1 [shape = 'u32[72,128]{1,0:T(1,128)}', space=vmem, size = 0x9000, scoped, tag = 'internal scratch']
  %s0 = inlined_call_operand.hbm [shape: f32[256,128], index: 0, kind: input, shape index: {}]
  %s1 = inlined_call_operand.hbm [shape: f32[128,256], index: 1, kind: input, shape index: {}]
  %s2 = inlined_call_operand.hbm [shape: f32[1,256], index: 2, kind: input, shape index: {}]
  %s3 = inlined_call_operand.hbm [shape: f32[256,128], index: 3, kind: input, shape index: {}]
  %s4 = inlined_call_operand.vmem [shape: f32[1,128], index: 4, kind: input, shape index: {}]
  %s5 = inlined_call_operand.vmem [shape: f32[1,128], index: 5, kind: input, shape index: {}]
  %s6 = inlined_call_operand.vmem [shape: f32[1,128], index: 6, kind: input, shape index: {}]
  %s7 = inlined_call_operand.hbm [shape: f32[256,128], index: 7, kind: output, shape index: {}]
  %s8 = sld [smem:[#allocation0]]
  $region77: #{tpu_custom_call.1} parent=0
    _
  %s10 = ssub.s32 1, %s8
  %s11 = scalar_select 0, %s10, %s8
  $region1: #{tpu_custom_call.1} parent=0
    #allocation2 [shape = 'u8[131072]{0}', space=vmem, size = 0x20000, scoped, tag = 'input window, operand 0']
    #allocation3 [shape = 's32[2]{0}', space=sflag, size = 0x8, scoped, tag = 'scoped memory for tpu_custom_call.1']
    #allocation4 [shape = 's32[2]{0}', space=sflag, size = 0x8, scoped, tag = 'scoped memory for tpu_custom_call.1']
    #allocation5 [shape = 'u8[131072]{0}', space=vmem, size = 0x20000, scoped, tag = 'input window, operand 1, single buffered']
    #allocation6 [shape = 's32[1]{0}', space=sflag, size = 0x4, scoped, tag = 'scoped memory for tpu_custom_call.1']
    #allocation7 [shape = 'u8[1024]{0}', space=vmem, size = 0x400, scoped, tag = 'input window, operand 2, single buffered']
    #allocation8 [shape = 'u8[131072]{0}', space=vmem, size = 0x20000, scoped, tag = 'input window, operand 3, single buffered']
    #allocation9 [shape = 's32[1]{0}', space=sflag, size = 0x4, scoped, tag = 'scoped memory for tpu_custom_call.1']
    #allocation10 [shape = 'u8[131072]{0}', space=vmem, size = 0x20000, scoped, tag = 'output window, operand 0']
    %12 = vsyncpa [#allocation3], 0
    %s13 = scalar_lea.sflag [#allocation3], 1
    %14 = vsyncpa %s13, 0
    %15 = vsyncpa [#allocation6], 0
    %16 = vsyncpa [#allocation9], 0
    %17 = vsyncpa [#allocation4], 0
    %s18 = scalar_lea.sflag [#allocation4], 1
    %19 = vsyncpa %s18, 0
    loop: start=0, step=1, limit=4
    $region2: #{tpu_custom_call.1} parent=1 // loop_pre_header
      _
    $region3: #{tpu_custom_call.1} parent=1 // loop_header
      %s21 = sphi 0, %s25
      %p22 = scmp.ge.s32.totalorder %s21, 4
      %s31 = sphi 0, %s33
      %s34 = sphi 0, %s31
      %s35 = sphi 0, %s34
      %s51 = sphi 0, %s35
      %s55 = sphi 0, %s55
      %s57 = sphi 0, %s55
      %s58 = sphi 0, %s57
      %s72 = sphi 0, %s58
      %s76 = sphi 0, %s76
      %s78 = sphi 0, %s76
      %s79 = sphi 0, %s78
      %s93 = sphi 0, %s79
      %s97 = sphi 0, %s97
      %s99 = sphi 0, %s97
      %s100 = sphi 0, %s99
      %s114 = sphi 0, %s100
      %s118 = sphi 0, %s118
      %s120 = sphi 0, %s118
      %s121 = sphi 0, %s120
      %s135 = sphi 0, %s121
      %s139 = sphi 0, %s139
      %s141 = sphi 0, %s139
      %s142 = sphi 0, %s141
      %s156 = sphi 0, %s142
      %s160 = sphi 0, %s160
      %s162 = sphi 0, %s160
      %s163 = sphi 0, %s162
      %s177 = sphi 0, %s163
      %s183 = sphi 0, %s185
      %s186 = sphi 0, %s183
      %s187 = sphi 0, %s186
      %s203 = sphi 0, %s187
    $region4: #{tpu_custom_call.1} parent=1 // loop_header_branch
      %24 = sbr.rel (%p22) target = $region8
    $region5: #{tpu_custom_call.1} parent=1 // loop_body
      %s26 = ssub.s32 %s21, 1
      %s27 = ssub.s32 %s21, 2
      %s28 = sadd.s32 %s21, 1
      %s29 = ssub.s32 %s21, %s28
      %p30 = scmp.eq.s32.totalorder %s29, 0
      %s32 = sadd.s32 %s31, 1
      %s33 = scalar_select %p30, %s31, %s32
      %p36 = pneg %p30
      %p37 = scmp.eq.s32.totalorder %s21, 1
      %p38 = por %p36, %p37
      %p39 = scmp.ne.s32.totalorder %s31, %s34
      %p40 = scmp.eq.s32.totalorder %s21, 0
      %p41 = por %p39, %p40
      %p42 = scmp.ne.s32.totalorder %s31, %s34
      %p43 = scmp.eq.s32.totalorder %s26, 1
      %p44 = por %p42, %p43
      %p45 = scmp.ne.s32.totalorder %s34, %s35
      %p46 = scmp.eq.s32.totalorder %s26, 0
      %p47 = por %p45, %p46
      %p48 = scmp.ne.s32.totalorder %s34, %s35
      %p49 = scmp.eq.s32.totalorder %s27, 1
      %p50 = por %p48, %p49
      %p52 = scmp.ne.s32.totalorder %s35, %s51
      %p53 = scmp.eq.s32.totalorder %s27, 0
      %p54 = por %p52, %p53
      %s56 = sadd.s32 %s55, 1
      %p59 = scmp.eq.s32.totalorder %s21, 1
      %p60 = scmp.ne.s32.totalorder %s55, %s57
      %p61 = scmp.eq.s32.totalorder %s21, 0
      %p62 = por %p60, %p61
      %p63 = scmp.ne.s32.totalorder %s55, %s57
      %p64 = scmp.eq.s32.totalorder %s26, 1
      %p65 = por %p63, %p64
      %p66 = scmp.ne.s32.totalorder %s57, %s58
      %p67 = scmp.eq.s32.totalorder %s26, 0
      %p68 = por %p66, %p67
      %p69 = scmp.ne.s32.totalorder %s57, %s58
      %p70 = scmp.eq.s32.totalorder %s27, 1
      %p71 = por %p69, %p70
      %p73 = scmp.ne.s32.totalorder %s58, %s72
      %p74 = scmp.eq.s32.totalorder %s27, 0
      %p75 = por %p73, %p74
      %s77 = sadd.s32 %s76, 1
      %p80 = scmp.eq.s32.totalorder %s21, 1
      %p81 = scmp.ne.s32.totalorder %s76, %s78
      %p82 = scmp.eq.s32.totalorder %s21, 0
      %p83 = por %p81, %p82
      %p84 = scmp.ne.s32.totalorder %s76, %s78
      %p85 = scmp.eq.s32.totalorder %s26, 1
      %p86 = por %p84, %p85
      %p87 = scmp.ne.s32.totalorder %s78, %s79
      %p88 = scmp.eq.s32.totalorder %s26, 0
      %p89 = por %p87, %p88
      %p90 = scmp.ne.s32.totalorder %s78, %s79
      %p91 = scmp.eq.s32.totalorder %s27, 1
      %p92 = por %p90, %p91
      %p94 = scmp.ne.s32.totalorder %s79, %s93
      %p95 = scmp.eq.s32.totalorder %s27, 0
      %p96 = por %p94, %p95
      %s98 = sadd.s32 %s97, 1
      %p101 = scmp.eq.s32.totalorder %s21, 1
      %p102 = scmp.ne.s32.totalorder %s97, %s99
      %p103 = scmp.eq.s32.totalorder %s21, 0
      %p104 = por %p102, %p103
      %p105 = scmp.ne.s32.totalorder %s97, %s99
      %p106 = scmp.eq.s32.totalorder %s26, 1
      %p107 = por %p105, %p106
      %p108 = scmp.ne.s32.totalorder %s99, %s100
      %p109 = scmp.eq.s32.totalorder %s26, 0
      %p110 = por %p108, %p109
      %p111 = scmp.ne.s32.totalorder %s99, %s100
      %p112 = scmp.eq.s32.totalorder %s27, 1
      %p113 = por %p111, %p112
      %p115 = scmp.ne.s32.totalorder %s100, %s114
      %p116 = scmp.eq.s32.totalorder %s27, 0
      %p117 = por %p115, %p116
      %s119 = sadd.s32 %s118, 1
      %p122 = scmp.eq.s32.totalorder %s21, 1
      %p123 = scmp.ne.s32.totalorder %s118, %s120
      %p124 = scmp.eq.s32.totalorder %s21, 0
      %p125 = por %p123, %p124
      %p126 = scmp.ne.s32.totalorder %s118, %s120
      %p127 = scmp.eq.s32.totalorder %s26, 1
      %p128 = por %p126, %p127
      %p129 = scmp.ne.s32.totalorder %s120, %s121
      %p130 = scmp.eq.s32.totalorder %s26, 0
      %p131 = por %p129, %p130
      %p132 = scmp.ne.s32.totalorder %s120, %s121
      %p133 = scmp.eq.s32.totalorder %s27, 1
      %p134 = por %p132, %p133
      %p136 = scmp.ne.s32.totalorder %s121, %s135
      %p137 = scmp.eq.s32.totalorder %s27, 0
      %p138 = por %p136, %p137
      %s140 = sadd.s32 %s139, 1
      %p143 = scmp.eq.s32.totalorder %s21, 1
      %p144 = scmp.ne.s32.totalorder %s139, %s141
      %p145 = scmp.eq.s32.totalorder %s21, 0
      %p146 = por %p144, %p145
      %p147 = scmp.ne.s32.totalorder %s139, %s141
      %p148 = scmp.eq.s32.totalorder %s26, 1
      %p149 = por %p147, %p148
      %p150 = scmp.ne.s32.totalorder %s141, %s142
      %p151 = scmp.eq.s32.totalorder %s26, 0
      %p152 = por %p150, %p151
      %p153 = scmp.ne.s32.totalorder %s141, %s142
      %p154 = scmp.eq.s32.totalorder %s27, 1
      %p155 = por %p153, %p154
      %p157 = scmp.ne.s32.totalorder %s142, %s156
      %p158 = scmp.eq.s32.totalorder %s27, 0
      %p159 = por %p157, %p158
      %s161 = sadd.s32 %s160, 1
      %p164 = scmp.eq.s32.totalorder %s21, 1
      %p165 = scmp.ne.s32.totalorder %s160, %s162
      %p166 = scmp.eq.s32.totalorder %s21, 0
      %p167 = por %p165, %p166
      %p168 = scmp.ne.s32.totalorder %s160, %s162
      %p169 = scmp.eq.s32.totalorder %s26, 1
      %p170 = por %p168, %p169
      %p171 = scmp.ne.s32.totalorder %s162, %s163
      %p172 = scmp.eq.s32.totalorder %s26, 0
      %p173 = por %p171, %p172
      %p174 = scmp.ne.s32.totalorder %s162, %s163
      %p175 = scmp.eq.s32.totalorder %s27, 1
      %p176 = por %p174, %p175
      %p178 = scmp.ne.s32.totalorder %s163, %s177
      %p179 = scmp.eq.s32.totalorder %s27, 0
      %p180 = por %p178, %p179
      %s181 = ssub.s32 %s21, %s28
      %p182 = scmp.eq.s32.totalorder %s181, 0
      %s184 = sadd.s32 %s183, 1
      %s185 = scalar_select %p182, %s183, %s184
      %p188 = pneg %p182
      %p189 = scmp.eq.s32.totalorder %s21, 1
      %p190 = por %p188, %p189
      %p191 = scmp.ne.s32.totalorder %s183, %s186
      %p192 = scmp.eq.s32.totalorder %s21, 0
      %p193 = por %p191, %p192
      %p194 = scmp.ne.s32.totalorder %s183, %s186
      %p195 = scmp.eq.s32.totalorder %s26, 1
      %p196 = por %p194, %p195
      %p197 = scmp.ne.s32.totalorder %s186, %s187
      %p198 = scmp.eq.s32.totalorder %s26, 0
      %p199 = por %p197, %p198
      %p200 = scmp.ne.s32.totalorder %s186, %s187
      %p201 = scmp.eq.s32.totalorder %s27, 1
      %p202 = por %p200, %p201
      %p204 = scmp.ne.s32.totalorder %s187, %s203
      %p205 = scmp.eq.s32.totalorder %s27, 0
      %p206 = por %p204, %p205
      %p207 = scmp.le.s32.totalorder 1, %s21
      %p208 = scmp.lt.s32.totalorder %s21, 3
      %p209 = pnand %p207, %p208
      %p210 = pneg %p209
      // Predicated region
      $region9: #{tpu_custom_call.1} parent=5 // pred_check
        _
      $region10: #{tpu_custom_call.1} parent=5 // pred_check_branch
        %212 = sbr.rel (%p209) target = $region12
      $region11: #{tpu_custom_call.1} parent=5 // pred_region
        %s213 = ssub.s32 %s21, 1
        // Predicated region
        $region13: #{tpu_custom_call.1} parent=11 // pred_check
          %p214 = pneg %p68
        $region14: #{tpu_custom_call.1} parent=11 // pred_check_branch
          %216 = sbr.rel (%p214) target = $region16
        $region15: #{tpu_custom_call.1} parent=11 // pred_region
          %218 = vsyncadd [#allocation6], 0
          %s219 = sshll.u32 %s1, 4
          %s220 = int_to_ptr.hbm [resolvable:$true] %s219
          %s221 = sshll.u32 [#allocation5], 4
          %s222 = int_to_ptr.vmem [resolvable:$true] %s221
          %227 = dma.hbm_to_vmem [thread:$0]  %s220, 4096, %s222, [#allocation6], 256, 256, 16
        $region16: #{tpu_custom_call.1} parent=11 // pred_fallthru
          _
        // Predicated region
        $region17: #{tpu_custom_call.1} parent=11 // pred_check
          %p228 = pneg %p89
        $region18: #{tpu_custom_call.1} parent=11 // pred_check_branch
          %230 = sbr.rel (%p228) target = $region20
        $region19: #{tpu_custom_call.1} parent=11 // pred_region
          %232 = vsyncadd [#allocation6], 0
          %s234 = sshll.u32 %s2, 4
          %s235 = int_to_ptr.hbm [resolvable:$true] %s234
          %s236 = sshll.u32 [#allocation7], 4
          %s237 = int_to_ptr.vmem [resolvable:$true] %s236
          %239 = dma.hbm_to_vmem [thread:$0]  %s235, 32, %s237, [#allocation6]
        $region20: #{tpu_custom_call.1} parent=11 // pred_fallthru
          _
        // Predicated region
        $region21: #{tpu_custom_call.1} parent=11 // pred_check
          %p240 = pneg %p110
        $region22: #{tpu_custom_call.1} parent=11 // pred_check_branch
          %242 = sbr.rel (%p240) target = $region24
        $region23: #{tpu_custom_call.1} parent=11 // pred_region
          %244 = vsyncadd [#allocation9], 0
          %s245 = sshll.u32 %s3, 4
          %s246 = int_to_ptr.hbm [resolvable:$true] %s245
          %s247 = sshll.u32 [#allocation8], 4
          %s248 = int_to_ptr.vmem [resolvable:$true] %s247
          %253 = dma.hbm_to_vmem [thread:$0]  %s246, 4096, %s248, [#allocation9], 128, 128, 8
        $region24: #{tpu_custom_call.1} parent=11 // pred_fallthru
          _
        // Predicated region
        $region25: #{tpu_custom_call.1} parent=11 // pred_check
          %p254 = pneg %p131
        $region26: #{tpu_custom_call.1} parent=11 // pred_check_branch
          %256 = sbr.rel (%p254) target = $region28
        $region27: #{tpu_custom_call.1} parent=11 // pred_region
          _
        $region28: #{tpu_custom_call.1} parent=11 // pred_fallthru
          _
        // Predicated region
        $region29: #{tpu_custom_call.1} parent=11 // pred_check
          %p257 = pneg %p152
        $region30: #{tpu_custom_call.1} parent=11 // pred_check_branch
          %259 = sbr.rel (%p257) target = $region32
        $region31: #{tpu_custom_call.1} parent=11 // pred_region
          _
        $region32: #{tpu_custom_call.1} parent=11 // pred_fallthru
          _
        // Predicated region
        $region33: #{tpu_custom_call.1} parent=11 // pred_check
          %p260 = pneg %p173
        $region34: #{tpu_custom_call.1} parent=11 // pred_check_branch
          %262 = sbr.rel (%p260) target = $region36
        $region35: #{tpu_custom_call.1} parent=11 // pred_region
          _
        $region36: #{tpu_custom_call.1} parent=11 // pred_fallthru
          _
      $region12: #{tpu_custom_call.1} parent=5 // pred_fallthru
        _
      %p263 = scmp.lt.s32.totalorder %s21, 2
      // Predicated region
      $region37: #{tpu_custom_call.1} parent=5 // pred_check
        %p264 = pneg %p263
      $region38: #{tpu_custom_call.1} parent=5 // pred_check_branch
        %266 = sbr.rel (%p264) target = $region40
      $region39: #{tpu_custom_call.1} parent=5 // pred_region
        // Predicated region
        $region41: #{tpu_custom_call.1} parent=39 // pred_check
          %p267 = pneg %p41
        $region42: #{tpu_custom_call.1} parent=39 // pred_check_branch
          %269 = sbr.rel (%p267) target = $region44
        $region43: #{tpu_custom_call.1} parent=39 // pred_region
          %s270 = sand.u32 %s31, 1
          %s271 = scalar_lea.sflag [#allocation3], %s270
          %s272 = sand.u32 %s31, 1
          %s273 = smul.addr %s272, 128
          %s274 = scalar_lea.vmem [#allocation2], %s273
          %s275 = smul.u32 16, %s21
          %277 = vsyncadd %s271, 0
          %s278 = smul.addr %s275, 8
          %s279 = scalar_lea.hbm %s0, %s278
          %s280 = sshll.u32 %s279, 4
          %s281 = int_to_ptr.hbm [resolvable:$true] %s280
          %s282 = sshll.u32 %s274, 4
          %s283 = int_to_ptr.vmem [resolvable:$true] %s282
          %288 = dma.hbm_to_vmem [thread:$0]  %s281, 2048, %s283, %s271, 128, 128, 8
        $region44: #{tpu_custom_call.1} parent=39 // pred_fallthru
          _
      $region40: #{tpu_custom_call.1} parent=5 // pred_fallthru
        _
      %p289 = scmp.le.s32.totalorder 1, %s21
      %p290 = scmp.lt.s32.totalorder %s21, 3
      %p291 = pnand %p289, %p290
      %p292 = pneg %p291
      // Predicated region
      $region45: #{tpu_custom_call.1} parent=5 // pred_check
        _
      $region46: #{tpu_custom_call.1} parent=5 // pred_check_branch
        %294 = sbr.rel (%p291) target = $region48
      $region47: #{tpu_custom_call.1} parent=5 // pred_region
        %s295 = ssub.s32 %s21, 1
        %s296 = sand.u32 %s34, 1
        %s297 = scalar_lea.sflag [#allocation3], %s296
        %s298 = sand.u32 %s34, 1
        %s299 = smul.addr %s298, 128
        %s300 = scalar_lea.vmem [#allocation2], %s299
        // Predicated region
        $region49: #{tpu_custom_call.1} parent=47 // pred_check
          %p301 = pneg %p47
        $region50: #{tpu_custom_call.1} parent=47 // pred_check_branch
          %303 = sbr.rel (%p301) target = $region52
        $region51: #{tpu_custom_call.1} parent=47 // pred_region
          %305 = dma.done %s297, 2048
        $region52: #{tpu_custom_call.1} parent=47 // pred_fallthru
          _
        // Predicated region
        $region53: #{tpu_custom_call.1} parent=47 // pred_check
          %p306 = pneg %p68
        $region54: #{tpu_custom_call.1} parent=47 // pred_check_branch
          %308 = sbr.rel (%p306) target = $region56
        $region55: #{tpu_custom_call.1} parent=47 // pred_region
          %310 = dma.done [#allocation6], 4096
        $region56: #{tpu_custom_call.1} parent=47 // pred_fallthru
          _
        // Predicated region
        $region57: #{tpu_custom_call.1} parent=47 // pred_check
          %p311 = pneg %p89
        $region58: #{tpu_custom_call.1} parent=47 // pred_check_branch
          %313 = sbr.rel (%p311) target = $region60
        $region59: #{tpu_custom_call.1} parent=47 // pred_region
          %315 = dma.done [#allocation6], 32
        $region60: #{tpu_custom_call.1} parent=47 // pred_fallthru
          _
        // Predicated region
        $region61: #{tpu_custom_call.1} parent=47 // pred_check
          %p316 = pneg %p110
        $region62: #{tpu_custom_call.1} parent=47 // pred_check_branch
          %318 = sbr.rel (%p316) target = $region64
        $region63: #{tpu_custom_call.1} parent=47 // pred_region
          %320 = dma.done [#allocation9], 4096
        $region64: #{tpu_custom_call.1} parent=47 // pred_fallthru
          _
        %s321 = sand.u32 %s34, 1
        %s322 = scalar_lea.sflag [#allocation3], %s321
        %s323 = sand.u32 %s34, 1
        %s324 = smul.addr %s323, 128
        %s325 = scalar_lea.vmem [#allocation2], %s324
        %p326 = pneg %p47
        %p327 = pneg %p44
        %p328 = pneg %p68
        %p329 = pneg %p65
        %p330 = pneg %p89
        %p331 = pneg %p86
        %p332 = pneg %p110
        %p333 = pneg %p107
        %p334 = pneg %p131
        %p335 = pneg %p128
        %p336 = pneg %p152
        %p337 = pneg %p149
        %p338 = pneg %p173
        %p339 = pneg %p170
        %p340 = pneg %p199
        %p341 = pneg %p196
        %s342 = sand.u32 %s186, 1
        %s343 = scalar_lea.sflag [#allocation4], %s342
        %s344 = sand.u32 %s186, 1
        %s345 = smul.addr %s344, 128
        %s346 = scalar_lea.vmem [#allocation10], %s345
        %s347 = smul.u32 16, %s26
        %s348 = smul.u32 16, %s26
        %v349 = vld [vmem:[%s300] sm:$0xff]
        %v350 = vld [vmem:[%s300 + $0x8] sm:$0xff]
        %v351 = vld [vmem:[%s300 + $0x10] sm:$0xff]
        %v352 = vld [vmem:[%s300 + $0x18] sm:$0xff]
        %v353 = vld [vmem:[%s300 + $0x20] sm:$0xff]
        %v354 = vld [vmem:[%s300 + $0x28] sm:$0xff]
        %v355 = vld [vmem:[%s300 + $0x30] sm:$0xff]
        %v356 = vld [vmem:[%s300 + $0x38] sm:$0xff]
        %v357 = vld [vmem:[%s300 + $0x40] sm:$0xff]
        %v358 = vld [vmem:[%s300 + $0x48] sm:$0xff]
        %v359 = vld [vmem:[%s300 + $0x50] sm:$0xff]
        %v360 = vld [vmem:[%s300 + $0x58] sm:$0xff]
        %v361 = vld [vmem:[%s300 + $0x60] sm:$0xff]
        %v362 = vld [vmem:[%s300 + $0x68] sm:$0xff]
        %v363 = vld [vmem:[%s300 + $0x70] sm:$0xff]
        %v364 = vld [vmem:[%s300 + $0x78] sm:$0xff]
        %v365 = vld [vmem:[#allocation5] sm:$0xff]
        %v366 = vld [vmem:[#allocation5 + $0x8] sm:$0xff]
        %v367 = vld [vmem:[#allocation5 + $0x10] sm:$0xff]
        %v368 = vld [vmem:[#allocation5 + $0x18] sm:$0xff]
        %v369 = vld [vmem:[#allocation5 + $0x20] sm:$0xff]
        %v370 = vld [vmem:[#allocation5 + $0x28] sm:$0xff]
        %v371 = vld [vmem:[#allocation5 + $0x30] sm:$0xff]
        %v372 = vld [vmem:[#allocation5 + $0x38] sm:$0xff]
        %v373 = vld [vmem:[#allocation5 + $0x40] sm:$0xff]
        %v374 = vld [vmem:[#allocation5 + $0x48] sm:$0xff]
        %v375 = vld [vmem:[#allocation5 + $0x50] sm:$0xff]
        %v376 = vld [vmem:[#allocation5 + $0x58] sm:$0xff]
        %v377 = vld [vmem:[#allocation5 + $0x60] sm:$0xff]
        %v378 = vld [vmem:[#allocation5 + $0x68] sm:$0xff]
        %v379 = vld [vmem:[#allocation5 + $0x70] sm:$0xff]
        %v380 = vld [vmem:[#allocation5 + $0x78] sm:$0xff]
        %v381 = vld [vmem:[#allocation5 + $0x80] sm:$0xff]
        %v382 = vld [vmem:[#allocation5 + $0x88] sm:$0xff]
        %v383 = vld [vmem:[#allocation5 + $0x90] sm:$0xff]
        %v384 = vld [vmem:[#allocation5 + $0x98] sm:$0xff]
        %v385 = vld [vmem:[#allocation5 + $0xa0] sm:$0xff]
        %v386 = vld [vmem:[#allocation5 + $0xa8] sm:$0xff]
        %v387 = vld [vmem:[#allocation5 + $0xb0] sm:$0xff]
        %v388 = vld [vmem:[#allocation5 + $0xb8] sm:$0xff]
        %v389 = vld [vmem:[#allocation5 + $0xc0] sm:$0xff]
        %v390 = vld [vmem:[#allocation5 + $0xc8] sm:$0xff]
        %v391 = vld [vmem:[#allocation5 + $0xd0] sm:$0xff]
        %v392 = vld [vmem:[#allocation5 + $0xd8] sm:$0xff]
        %v393 = vld [vmem:[#allocation5 + $0xe0] sm:$0xff]
        %v394 = vld [vmem:[#allocation5 + $0xe8] sm:$0xff]
        %v395 = vld [vmem:[#allocation5 + $0xf0] sm:$0xff]
        %v396 = vld [vmem:[#allocation5 + $0xf8] sm:$0xff]
        %v397 = vld [vmem:[#allocation7] sm:$0x3]
        %v399 = vperm.slane %v397, 0
        %v400 = vperm.slane %v397, 1
        %403 = vmatpush.msra.mxu0 %v395
        %404 = vmatpush.msra.mxu0 %v393
        %405 = vmatpush.msra.mxu0 %v391
        %406 = vmatpush.msra.mxu0 %v389
        %407 = vmatpush.msra.mxu0 %v387
        %408 = vmatpush.msra.mxu0 %v385
        %409 = vmatpush.msra.mxu0 %v383
        %410 = vmatpush.msra.mxu0 %v381
        %411 = vmatpush.msra.mxu0 %v379
        %412 = vmatpush.msra.mxu0 %v377
        %413 = vmatpush.msra.mxu0 %v375
        %414 = vmatpush.msra.mxu0 %v373
        %415 = vmatpush.msra.mxu0 %v371
        %416 = vmatpush.msra.mxu0 %v369
        %417 = vmatpush.msra.mxu0 %v367
        %418 = vmatpush.msra.mxu0 %v365
        %419 = vmatmul.f32.gmra.mxu0 %v349
        %v420 = vpop.f32.mrf.mxu0
        %v421 = vadd.f32 %v399, %v420
        %422 = vmatmul.f32.gmra.mxu0 %v350
        %v423 = vpop.f32.mrf.mxu0
        %v424 = vadd.f32 %v399, %v423
        %425 = vmatmul.f32.gmra.mxu0 %v351
        %v426 = vpop.f32.mrf.mxu0
        %v427 = vadd.f32 %v399, %v426
        %428 = vmatmul.f32.gmra.mxu0 %v352
        %v429 = vpop.f32.mrf.mxu0
        %v430 = vadd.f32 %v399, %v429
        %431 = vmatmul.f32.gmra.mxu0 %v353
        %v432 = vpop.f32.mrf.mxu0
        %v433 = vadd.f32 %v399, %v432
        %434 = vmatmul.f32.gmra.mxu0 %v354
        %v435 = vpop.f32.mrf.mxu0
        %v436 = vadd.f32 %v399, %v435
        %437 = vmatmul.f32.gmra.mxu0 %v355
        %v438 = vpop.f32.mrf.mxu0
        %v439 = vadd.f32 %v399, %v438
        %440 = vmatmul.f32.gmra.mxu0 %v356
        %v441 = vpop.f32.mrf.mxu0
        %v442 = vadd.f32 %v399, %v441
        %443 = vmatmul.f32.gmra.mxu0 %v357
        %v444 = vpop.f32.mrf.mxu0
        %v445 = vadd.f32 %v399, %v444
        %446 = vmatmul.f32.gmra.mxu0 %v358
        %v447 = vpop.f32.mrf.mxu0
        %v448 = vadd.f32 %v399, %v447
        %449 = vmatmul.f32.gmra.mxu0 %v359
        %v450 = vpop.f32.mrf.mxu0
        %v451 = vadd.f32 %v399, %v450
        %452 = vmatmul.f32.gmra.mxu0 %v360
        %v453 = vpop.f32.mrf.mxu0
        %v454 = vadd.f32 %v399, %v453
        %455 = vmatmul.f32.gmra.mxu0 %v361
        %v456 = vpop.f32.mrf.mxu0
        %v457 = vadd.f32 %v399, %v456
        %458 = vmatmul.f32.gmra.mxu0 %v362
        %v459 = vpop.f32.mrf.mxu0
        %v460 = vadd.f32 %v399, %v459
        %461 = vmatmul.f32.gmra.mxu0 %v363
        %v462 = vpop.f32.mrf.mxu0
        %v463 = vadd.f32 %v399, %v462
        %464 = vmatmul.f32.gmra.mxu0 %v364
        %v465 = vpop.f32.mrf.mxu0
        %v466 = vadd.f32 %v399, %v465
        %467 = vdwg.mxu0
        %468 = vmatpush.msra.mxu0 %v396
        %469 = vmatpush.msra.mxu0 %v394
        %470 = vmatpush.msra.mxu0 %v392
        %471 = vmatpush.msra.mxu0 %v390
        %472 = vmatpush.msra.mxu0 %v388
        %473 = vmatpush.msra.mxu0 %v386
        %474 = vmatpush.msra.mxu0 %v384
        %475 = vmatpush.msra.mxu0 %v382
        %476 = vmatpush.msra.mxu0 %v380
        %477 = vmatpush.msra.mxu0 %v378
        %478 = vmatpush.msra.mxu0 %v376
        %479 = vmatpush.msra.mxu0 %v374
        %480 = vmatpush.msra.mxu0 %v372
        %481 = vmatpush.msra.mxu0 %v370
        %482 = vmatpush.msra.mxu0 %v368
        %483 = vmatpush.msra.mxu0 %v366
        %484 = vmatmul.f32.gmra.mxu0 %v349
        %v485 = vpop.f32.mrf.mxu0
        %v486 = vadd.f32 %v400, %v485
        %487 = vmatmul.f32.gmra.mxu0 %v350
        %v488 = vpop.f32.mrf.mxu0
        %v489 = vadd.f32 %v400, %v488
        %490 = vmatmul.f32.gmra.mxu0 %v351
        %v491 = vpop.f32.mrf.mxu0
        %v492 = vadd.f32 %v400, %v491
        %493 = vmatmul.f32.gmra.mxu0 %v352
        %v494 = vpop.f32.mrf.mxu0
        %v495 = vadd.f32 %v400, %v494
        %496 = vmatmul.f32.gmra.mxu0 %v353
        %v497 = vpop.f32.mrf.mxu0
        %v498 = vadd.f32 %v400, %v497
        %499 = vmatmul.f32.gmra.mxu0 %v354
        %v500 = vpop.f32.mrf.mxu0
        %v501 = vadd.f32 %v400, %v500
        %502 = vmatmul.f32.gmra.mxu0 %v355
        %v503 = vpop.f32.mrf.mxu0
        %v504 = vadd.f32 %v400, %v503
        %505 = vmatmul.f32.gmra.mxu0 %v356
        %v506 = vpop.f32.mrf.mxu0
        %v507 = vadd.f32 %v400, %v506
        %508 = vmatmul.f32.gmra.mxu0 %v357
        %v509 = vpop.f32.mrf.mxu0
        %v510 = vadd.f32 %v400, %v509
        %511 = vmatmul.f32.gmra.mxu0 %v358
        %v512 = vpop.f32.mrf.mxu0
        %v513 = vadd.f32 %v400, %v512
        %514 = vmatmul.f32.gmra.mxu0 %v359
        %v515 = vpop.f32.mrf.mxu0
        %v516 = vadd.f32 %v400, %v515
        %517 = vmatmul.f32.gmra.mxu0 %v360
        %v518 = vpop.f32.mrf.mxu0
        %v519 = vadd.f32 %v400, %v518
        %520 = vmatmul.f32.gmra.mxu0 %v361
        %v521 = vpop.f32.mrf.mxu0
        %v522 = vadd.f32 %v400, %v521
        %523 = vmatmul.f32.gmra.mxu0 %v362
        %v524 = vpop.f32.mrf.mxu0
        %v525 = vadd.f32 %v400, %v524
        %526 = vmatmul.f32.gmra.mxu0 %v363
        %v527 = vpop.f32.mrf.mxu0
        %v528 = vadd.f32 %v400, %v527
        %529 = vmatmul.f32.gmra.mxu0 %v364
        %v530 = vpop.f32.mrf.mxu0
        %v531 = vadd.f32 %v400, %v530
        %532 = vdwg.mxu0
        %v533 = vmax.f32 %v421, 0.0
        %v534 = vmax.f32 %v486, 0.0
        %v535 = vmax.f32 %v424, 0.0
        %v536 = vmax.f32 %v489, 0.0
        %v537 = vmax.f32 %v427, 0.0
        %v538 = vmax.f32 %v492, 0.0
        %v539 = vmax.f32 %v430, 0.0
        %v540 = vmax.f32 %v495, 0.0
        %v541 = vmax.f32 %v433, 0.0
        %v542 = vmax.f32 %v498, 0.0
        %v543 = vmax.f32 %v436, 0.0
        %v544 = vmax.f32 %v501, 0.0
        %v545 = vmax.f32 %v439, 0.0
        %v546 = vmax.f32 %v504, 0.0
        %v547 = vmax.f32 %v442, 0.0
        %v548 = vmax.f32 %v507, 0.0
        %v549 = vmax.f32 %v445, 0.0
        %v550 = vmax.f32 %v510, 0.0
        %v551 = vmax.f32 %v448, 0.0
        %v552 = vmax.f32 %v513, 0.0
        %v553 = vmax.f32 %v451, 0.0
        %v554 = vmax.f32 %v516, 0.0
        %v555 = vmax.f32 %v454, 0.0
        %v556 = vmax.f32 %v519, 0.0
        %v557 = vmax.f32 %v457, 0.0
        %v558 = vmax.f32 %v522, 0.0
        %v559 = vmax.f32 %v460, 0.0
        %v560 = vmax.f32 %v525, 0.0
        %v561 = vmax.f32 %v463, 0.0
        %v562 = vmax.f32 %v528, 0.0
        %v563 = vmax.f32 %v466, 0.0
        %v564 = vmax.f32 %v531, 0.0
        %v565 = vld [vmem:[#allocation8] sm:$0xff]
        %v566 = vld [vmem:[#allocation8 + $0x8] sm:$0xff]
        %v567 = vld [vmem:[#allocation8 + $0x10] sm:$0xff]
        %v568 = vld [vmem:[#allocation8 + $0x18] sm:$0xff]
        %v569 = vld [vmem:[#allocation8 + $0x20] sm:$0xff]
        %v570 = vld [vmem:[#allocation8 + $0x28] sm:$0xff]
        %v571 = vld [vmem:[#allocation8 + $0x30] sm:$0xff]
        %v572 = vld [vmem:[#allocation8 + $0x38] sm:$0xff]
        %v573 = vld [vmem:[#allocation8 + $0x40] sm:$0xff]
        %v574 = vld [vmem:[#allocation8 + $0x48] sm:$0xff]
        %v575 = vld [vmem:[#allocation8 + $0x50] sm:$0xff]
        %v576 = vld [vmem:[#allocation8 + $0x58] sm:$0xff]
        %v577 = vld [vmem:[#allocation8 + $0x60] sm:$0xff]
        %v578 = vld [vmem:[#allocation8 + $0x68] sm:$0xff]
        %v579 = vld [vmem:[#allocation8 + $0x70] sm:$0xff]
        %v580 = vld [vmem:[#allocation8 + $0x78] sm:$0xff]
        %v581 = vld [vmem:[#allocation8 + $0x80] sm:$0xff]
        %v582 = vld [vmem:[#allocation8 + $0x88] sm:$0xff]
        %v583 = vld [vmem:[#allocation8 + $0x90] sm:$0xff]
        %v584 = vld [vmem:[#allocation8 + $0x98] sm:$0xff]
        %v585 = vld [vmem:[#allocation8 + $0xa0] sm:$0xff]
        %v586 = vld [vmem:[#allocation8 + $0xa8] sm:$0xff]
        %v587 = vld [vmem:[#allocation8 + $0xb0] sm:$0xff]
        %v588 = vld [vmem:[#allocation8 + $0xb8] sm:$0xff]
        %v589 = vld [vmem:[#allocation8 + $0xc0] sm:$0xff]
        %v590 = vld [vmem:[#allocation8 + $0xc8] sm:$0xff]
        %v591 = vld [vmem:[#allocation8 + $0xd0] sm:$0xff]
        %v592 = vld [vmem:[#allocation8 + $0xd8] sm:$0xff]
        %v593 = vld [vmem:[#allocation8 + $0xe0] sm:$0xff]
        %v594 = vld [vmem:[#allocation8 + $0xe8] sm:$0xff]
        %v595 = vld [vmem:[#allocation8 + $0xf0] sm:$0xff]
        %v596 = vld [vmem:[#allocation8 + $0xf8] sm:$0xff]
        %v597 = vld [vmem:[%s4] sm:$0x1]
        %v599 = vperm.slane %v597, 0
        %601 = vmatpush.msra.mxu0 %v580
        %602 = vmatpush.msra.mxu0 %v579
        %603 = vmatpush.msra.mxu0 %v578
        %604 = vmatpush.msra.mxu0 %v577
        %605 = vmatpush.msra.mxu0 %v576
        %606 = vmatpush.msra.mxu0 %v575
        %607 = vmatpush.msra.mxu0 %v574
        %608 = vmatpush.msra.mxu0 %v573
        %609 = vmatpush.msra.mxu0 %v572
        %610 = vmatpush.msra.mxu0 %v571
        %611 = vmatpush.msra.mxu0 %v570
        %612 = vmatpush.msra.mxu0 %v569
        %613 = vmatpush.msra.mxu0 %v568
        %614 = vmatpush.msra.mxu0 %v567
        %615 = vmatpush.msra.mxu0 %v566
        %616 = vmatpush.msra.mxu0 %v565
        %617 = vmatmul.f32.gmra.mxu0 %v533
        %v618 = vpop.f32.mrf.mxu0
        %v619 = vadd.f32 %v599, %v618
        %620 = vmatmul.f32.gmra.mxu0 %v535
        %v621 = vpop.f32.mrf.mxu0
        %v622 = vadd.f32 %v599, %v621
        %623 = vmatmul.f32.gmra.mxu0 %v537
        %v624 = vpop.f32.mrf.mxu0
        %v625 = vadd.f32 %v599, %v624
        %626 = vmatmul.f32.gmra.mxu0 %v539
        %v627 = vpop.f32.mrf.mxu0
        %v628 = vadd.f32 %v599, %v627
        %629 = vmatmul.f32.gmra.mxu0 %v541
        %v630 = vpop.f32.mrf.mxu0
        %v631 = vadd.f32 %v599, %v630
        %632 = vmatmul.f32.gmra.mxu0 %v543
        %v633 = vpop.f32.mrf.mxu0
        %v634 = vadd.f32 %v599, %v633
        %635 = vmatmul.f32.gmra.mxu0 %v545
        %v636 = vpop.f32.mrf.mxu0
        %v637 = vadd.f32 %v599, %v636
        %638 = vmatmul.f32.gmra.mxu0 %v547
        %v639 = vpop.f32.mrf.mxu0
        %v640 = vadd.f32 %v599, %v639
        %641 = vmatmul.f32.gmra.mxu0 %v549
        %v642 = vpop.f32.mrf.mxu0
        %v643 = vadd.f32 %v599, %v642
        %644 = vmatmul.f32.gmra.mxu0 %v551
        %v645 = vpop.f32.mrf.mxu0
        %v646 = vadd.f32 %v599, %v645
        %647 = vmatmul.f32.gmra.mxu0 %v553
        %v648 = vpop.f32.mrf.mxu0
        %v649 = vadd.f32 %v599, %v648
        %650 = vmatmul.f32.gmra.mxu0 %v555
        %v651 = vpop.f32.mrf.mxu0
        %v652 = vadd.f32 %v599, %v651
        %653 = vmatmul.f32.gmra.mxu0 %v557
        %v654 = vpop.f32.mrf.mxu0
        %v655 = vadd.f32 %v599, %v654
        %656 = vmatmul.f32.gmra.mxu0 %v559
        %v657 = vpop.f32.mrf.mxu0
        %v658 = vadd.f32 %v599, %v657
        %659 = vmatmul.f32.gmra.mxu0 %v561
        %v660 = vpop.f32.mrf.mxu0
        %v661 = vadd.f32 %v599, %v660
        %662 = vmatmul.f32.gmra.mxu0 %v563
        %v663 = vpop.f32.mrf.mxu0
        %v664 = vadd.f32 %v599, %v663
        %665 = vdwg.mxu0
        %666 = vmatpush.msra.mxu0 %v596
        %667 = vmatpush.msra.mxu0 %v595
        %668 = vmatpush.msra.mxu0 %v594
        %669 = vmatpush.msra.mxu0 %v593
        %670 = vmatpush.msra.mxu0 %v592
        %671 = vmatpush.msra.mxu0 %v591
        %672 = vmatpush.msra.mxu0 %v590
        %673 = vmatpush.msra.mxu0 %v589
        %674 = vmatpush.msra.mxu0 %v588
        %675 = vmatpush.msra.mxu0 %v587
        %676 = vmatpush.msra.mxu0 %v586
        %677 = vmatpush.msra.mxu0 %v585
        %678 = vmatpush.msra.mxu0 %v584
        %679 = vmatpush.msra.mxu0 %v583
        %680 = vmatpush.msra.mxu0 %v582
        %681 = vmatpush.msra.mxu0 %v581
        %682 = vmatmul.f32.gmra.mxu0 %v534
        %v683 = vpop.f32.mrf.mxu0
        %v684 = vadd.f32 %v619, %v683
        %685 = vmatmul.f32.gmra.mxu0 %v536
        %v686 = vpop.f32.mrf.mxu0
        %v687 = vadd.f32 %v622, %v686
        %688 = vmatmul.f32.gmra.mxu0 %v538
        %v689 = vpop.f32.mrf.mxu0
        %v690 = vadd.f32 %v625, %v689
        %691 = vmatmul.f32.gmra.mxu0 %v540
        %v692 = vpop.f32.mrf.mxu0
        %v693 = vadd.f32 %v628, %v692
        %694 = vmatmul.f32.gmra.mxu0 %v542
        %v695 = vpop.f32.mrf.mxu0
        %v696 = vadd.f32 %v631, %v695
        %697 = vmatmul.f32.gmra.mxu0 %v544
        %v698 = vpop.f32.mrf.mxu0
        %v699 = vadd.f32 %v634, %v698
        %700 = vmatmul.f32.gmra.mxu0 %v546
        %v701 = vpop.f32.mrf.mxu0
        %v702 = vadd.f32 %v637, %v701
        %703 = vmatmul.f32.gmra.mxu0 %v548
        %v704 = vpop.f32.mrf.mxu0
        %v705 = vadd.f32 %v640, %v704
        %706 = vmatmul.f32.gmra.mxu0 %v550
        %v707 = vpop.f32.mrf.mxu0
        %v708 = vadd.f32 %v643, %v707
        %709 = vmatmul.f32.gmra.mxu0 %v552
        %v710 = vpop.f32.mrf.mxu0
        %v711 = vadd.f32 %v646, %v710
        %712 = vmatmul.f32.gmra.mxu0 %v554
        %v713 = vpop.f32.mrf.mxu0
        %v714 = vadd.f32 %v649, %v713
        %715 = vmatmul.f32.gmra.mxu0 %v556
        %v716 = vpop.f32.mrf.mxu0
        %v717 = vadd.f32 %v652, %v716
        %718 = vmatmul.f32.gmra.mxu0 %v558
        %v719 = vpop.f32.mrf.mxu0
        %v720 = vadd.f32 %v655, %v719
        %721 = vmatmul.f32.gmra.mxu0 %v560
        %v722 = vpop.f32.mrf.mxu0
        %v723 = vadd.f32 %v658, %v722
        %724 = vmatmul.f32.gmra.mxu0 %v562
        %v725 = vpop.f32.mrf.mxu0
        %v726 = vadd.f32 %v661, %v725
        %727 = vmatmul.f32.gmra.mxu0 %v564
        %v728 = vpop.f32.mrf.mxu0
        %v729 = vadd.f32 %v664, %v728
        %730 = vdwg.mxu0
        %v731 = vadd.f32 %v684, %v349
        %v732 = vadd.f32 %v687, %v350
        %v733 = vadd.f32 %v690, %v351
        %v734 = vadd.f32 %v693, %v352
        %v735 = vadd.f32 %v696, %v353
        %v736 = vadd.f32 %v699, %v354
        %v737 = vadd.f32 %v702, %v355
        %v738 = vadd.f32 %v705, %v356
        %v739 = vadd.f32 %v708, %v357
        %v740 = vadd.f32 %v711, %v358
        %v741 = vadd.f32 %v714, %v359
        %v742 = vadd.f32 %v717, %v360
        %v743 = vadd.f32 %v720, %v361
        %v744 = vadd.f32 %v723, %v362
        %v745 = vadd.f32 %v726, %v363
        %v746 = vadd.f32 %v729, %v364
        %747 = vadd.xlane.f32.xlu0 %v731
        %v748 = vpop.xlane.xlu0 %747
        %749 = vadd.xlane.f32.xlu0 %v732
        %v750 = vpop.xlane.xlu0 %749
        %751 = vadd.xlane.f32.xlu0 %v733
        %v752 = vpop.xlane.xlu0 %751
        %753 = vadd.xlane.f32.xlu0 %v734
        %v754 = vpop.xlane.xlu0 %753
        %755 = vadd.xlane.f32.xlu0 %v735
        %v756 = vpop.xlane.xlu0 %755
        %757 = vadd.xlane.f32.xlu0 %v736
        %v758 = vpop.xlane.xlu0 %757
        %759 = vadd.xlane.f32.xlu0 %v737
        %v760 = vpop.xlane.xlu0 %759
        %761 = vadd.xlane.f32.xlu0 %v738
        %v762 = vpop.xlane.xlu0 %761
        %763 = vadd.xlane.f32.xlu0 %v739
        %v764 = vpop.xlane.xlu0 %763
        %765 = vadd.xlane.f32.xlu0 %v740
        %v766 = vpop.xlane.xlu0 %765
        %767 = vadd.xlane.f32.xlu0 %v741
        %v768 = vpop.xlane.xlu0 %767
        %769 = vadd.xlane.f32.xlu0 %v742
        %v770 = vpop.xlane.xlu0 %769
        %771 = vadd.xlane.f32.xlu0 %v743
        %v772 = vpop.xlane.xlu0 %771
        %773 = vadd.xlane.f32.xlu0 %v744
        %v774 = vpop.xlane.xlu0 %773
        %775 = vadd.xlane.f32.xlu0 %v745
        %v776 = vpop.xlane.xlu0 %775
        %777 = vadd.xlane.f32.xlu0 %v746
        %v778 = vpop.xlane.xlu0 %777
        %v779 = vrcp.pop 128.0
        %v780 = vmul.f32 128.0, %v779
        %v781 = vsub.f32 1.0, %v780
        %v782 = vmul.f32 %v779, %v781
        %v783 = vadd.f32 %v779, %v782
        %vm784 = vweird.f32 %v779
        %v785 = vsel %vm784, %v779, %v783
        %v786 = vmul.f32 %v748, %v785
        %v787 = vmul.f32 %v750, %v785
        %v788 = vmul.f32 %v752, %v785
        %v789 = vmul.f32 %v754, %v785
        %v790 = vmul.f32 %v756, %v785
        %v791 = vmul.f32 %v758, %v785
        %v792 = vmul.f32 %v760, %v785
        %v793 = vmul.f32 %v762, %v785
        %v794 = vmul.f32 %v764, %v785
        %v795 = vmul.f32 %v766, %v785
        %v796 = vmul.f32 %v768, %v785
        %v797 = vmul.f32 %v770, %v785
        %v798 = vmul.f32 %v772, %v785
        %v799 = vmul.f32 %v774, %v785
        %v800 = vmul.f32 %v776, %v785
        %v801 = vmul.f32 %v778, %v785
        %v802 = vsub.f32 %v731, %v786
        %v803 = vsub.f32 %v732, %v787
        %v804 = vsub.f32 %v733, %v788
        %v805 = vsub.f32 %v734, %v789
        %v806 = vsub.f32 %v735, %v790
        %v807 = vsub.f32 %v736, %v791
        %v808 = vsub.f32 %v737, %v792
        %v809 = vsub.f32 %v738, %v793
        %v810 = vsub.f32 %v739, %v794
        %v811 = vsub.f32 %v740, %v795
        %v812 = vsub.f32 %v741, %v796
        %v813 = vsub.f32 %v742, %v797
        %v814 = vsub.f32 %v743, %v798
        %v815 = vsub.f32 %v744, %v799
        %v816 = vsub.f32 %v745, %v800
        %v817 = vsub.f32 %v746, %v801
        %v818 = vmul.f32 %v802, %v802
        %v819 = vmul.f32 %v803, %v803
        %v820 = vmul.f32 %v804, %v804
        %v821 = vmul.f32 %v805, %v805
        %v822 = vmul.f32 %v806, %v806
        %v823 = vmul.f32 %v807, %v807
        %v824 = vmul.f32 %v808, %v808
        %v825 = vmul.f32 %v809, %v809
        %v826 = vmul.f32 %v810, %v810
        %v827 = vmul.f32 %v811, %v811
        %v828 = vmul.f32 %v812, %v812
        %v829 = vmul.f32 %v813, %v813
        %v830 = vmul.f32 %v814, %v814
        %v831 = vmul.f32 %v815, %v815
        %v832 = vmul.f32 %v816, %v816
        %v833 = vmul.f32 %v817, %v817
        %834 = vadd.xlane.f32.xlu0 %v818
        %v835 = vpop.xlane.xlu0 %834
        %836 = vadd.xlane.f32.xlu0 %v819
        %v837 = vpop.xlane.xlu0 %836
        %838 = vadd.xlane.f32.xlu0 %v820
        %v839 = vpop.xlane.xlu0 %838
        %840 = vadd.xlane.f32.xlu0 %v821
        %v841 = vpop.xlane.xlu0 %840
        %842 = vadd.xlane.f32.xlu0 %v822
        %v843 = vpop.xlane.xlu0 %842
        %844 = vadd.xlane.f32.xlu0 %v823
        %v845 = vpop.xlane.xlu0 %844
        %846 = vadd.xlane.f32.xlu0 %v824
        %v847 = vpop.xlane.xlu0 %846
        %848 = vadd.xlane.f32.xlu0 %v825
        %v849 = vpop.xlane.xlu0 %848
        %850 = vadd.xlane.f32.xlu0 %v826
        %v851 = vpop.xlane.xlu0 %850
        %852 = vadd.xlane.f32.xlu0 %v827
        %v853 = vpop.xlane.xlu0 %852
        %854 = vadd.xlane.f32.xlu0 %v828
        %v855 = vpop.xlane.xlu0 %854
        %856 = vadd.xlane.f32.xlu0 %v829
        %v857 = vpop.xlane.xlu0 %856
        %858 = vadd.xlane.f32.xlu0 %v830
        %v859 = vpop.xlane.xlu0 %858
        %860 = vadd.xlane.f32.xlu0 %v831
        %v861 = vpop.xlane.xlu0 %860
        %862 = vadd.xlane.f32.xlu0 %v832
        %v863 = vpop.xlane.xlu0 %862
        %864 = vadd.xlane.f32.xlu0 %v833
        %v865 = vpop.xlane.xlu0 %864
        %v866 = vmul.f32 %v835, 0.007874016
        %v867 = vmul.f32 %v837, 0.007874016
        %v868 = vmul.f32 %v839, 0.007874016
        %v869 = vmul.f32 %v841, 0.007874016
        %v870 = vmul.f32 %v843, 0.007874016
        %v871 = vmul.f32 %v845, 0.007874016
        %v872 = vmul.f32 %v847, 0.007874016
        %v873 = vmul.f32 %v849, 0.007874016
        %v874 = vmul.f32 %v851, 0.007874016
        %v875 = vmul.f32 %v853, 0.007874016
        %v876 = vmul.f32 %v855, 0.007874016
        %v877 = vmul.f32 %v857, 0.007874016
        %v878 = vmul.f32 %v859, 0.007874016
        %v879 = vmul.f32 %v861, 0.007874016
        %v880 = vmul.f32 %v863, 0.007874016
        %v881 = vmul.f32 %v865, 0.007874016
        %v882 = vrsqrt.pop %v866
        %v883 = vmul.f32 %v882, %v866
        %v884 = vmul.f32 %v883, %v882
        %v885 = vmul.f32 0.5, %v884
        %v886 = vsub.f32 1.5, %v885
        %v887 = vmul.f32 %v882, %v886
        %v888 = vmul.f32 %v866, %v887
        %vm889 = vcmp.eq.f32.partialorder %v866, inf
        %v890 = vsel %vm889, %v866, %v888
        %vm891 = vcmp.eq.f32.partialorder %v866, 0.0
        %v892 = vand.u32 %v866, 2147483648
        %v893 = vsel %vm891, %v892, %v890
        %v894 = vrsqrt.pop %v867
        %v895 = vmul.f32 %v894, %v867
        %v896 = vmul.f32 %v895, %v894
        %v897 = vmul.f32 0.5, %v896
        %v898 = vsub.f32 1.5, %v897
        %v899 = vmul.f32 %v894, %v898
        %v900 = vmul.f32 %v867, %v899
        %vm901 = vcmp.eq.f32.partialorder %v867, inf
        %v902 = vsel %vm901, %v867, %v900
        %vm903 = vcmp.eq.f32.partialorder %v867, 0.0
        %v904 = vand.u32 %v867, 2147483648
        %v905 = vsel %vm903, %v904, %v902
        %v906 = vrsqrt.pop %v868
        %v907 = vmul.f32 %v906, %v868
        %v908 = vmul.f32 %v907, %v906
        %v909 = vmul.f32 0.5, %v908
        %v910 = vsub.f32 1.5, %v909
        %v911 = vmul.f32 %v906, %v910
        %v912 = vmul.f32 %v868, %v911
        %vm913 = vcmp.eq.f32.partialorder %v868, inf
        %v914 = vsel %vm913, %v868, %v912
        %vm915 = vcmp.eq.f32.partialorder %v868, 0.0
        %v916 = vand.u32 %v868, 2147483648
        %v917 = vsel %vm915, %v916, %v914
        %v918 = vrsqrt.pop %v869
        %v919 = vmul.f32 %v918, %v869
        %v920 = vmul.f32 %v919, %v918
        %v921 = vmul.f32 0.5, %v920
        %v922 = vsub.f32 1.5, %v921
        %v923 = vmul.f32 %v918, %v922
        %v924 = vmul.f32 %v869, %v923
        %vm925 = vcmp.eq.f32.partialorder %v869, inf
        %v926 = vsel %vm925, %v869, %v924
        %vm927 = vcmp.eq.f32.partialorder %v869, 0.0
        %v928 = vand.u32 %v869, 2147483648
        %v929 = vsel %vm927, %v928, %v926
        %v930 = vrsqrt.pop %v870
        %v931 = vmul.f32 %v930, %v870
        %v932 = vmul.f32 %v931, %v930
        %v933 = vmul.f32 0.5, %v932
        %v934 = vsub.f32 1.5, %v933
        %v935 = vmul.f32 %v930, %v934
        %v936 = vmul.f32 %v870, %v935
        %vm937 = vcmp.eq.f32.partialorder %v870, inf
        %v938 = vsel %vm937, %v870, %v936
        %vm939 = vcmp.eq.f32.partialorder %v870, 0.0
        %v940 = vand.u32 %v870, 2147483648
        %v941 = vsel %vm939, %v940, %v938
        %v942 = vrsqrt.pop %v871
        %v943 = vmul.f32 %v942, %v871
        %v944 = vmul.f32 %v943, %v942
        %v945 = vmul.f32 0.5, %v944
        %v946 = vsub.f32 1.5, %v945
        %v947 = vmul.f32 %v942, %v946
        %v948 = vmul.f32 %v871, %v947
        %vm949 = vcmp.eq.f32.partialorder %v871, inf
        %v950 = vsel %vm949, %v871, %v948
        %vm951 = vcmp.eq.f32.partialorder %v871, 0.0
        %v952 = vand.u32 %v871, 2147483648
        %v953 = vsel %vm951, %v952, %v950
        %v954 = vrsqrt.pop %v872
        %v955 = vmul.f32 %v954, %v872
        %v956 = vmul.f32 %v955, %v954
        %v957 = vmul.f32 0.5, %v956
        %v958 = vsub.f32 1.5, %v957
        %v959 = vmul.f32 %v954, %v958
        %v960 = vmul.f32 %v872, %v959
        %vm961 = vcmp.eq.f32.partialorder %v872, inf
        %v962 = vsel %vm961, %v872, %v960
        %vm963 = vcmp.eq.f32.partialorder %v872, 0.0
        %v964 = vand.u32 %v872, 2147483648
        %v965 = vsel %vm963, %v964, %v962
        %v966 = vrsqrt.pop %v873
        %v967 = vmul.f32 %v966, %v873
        %v968 = vmul.f32 %v967, %v966
        %v969 = vmul.f32 0.5, %v968
        %v970 = vsub.f32 1.5, %v969
        %v971 = vmul.f32 %v966, %v970
        %v972 = vmul.f32 %v873, %v971
        %vm973 = vcmp.eq.f32.partialorder %v873, inf
        %v974 = vsel %vm973, %v873, %v972
        %vm975 = vcmp.eq.f32.partialorder %v873, 0.0
        %v976 = vand.u32 %v873, 2147483648
        %v977 = vsel %vm975, %v976, %v974
        %v978 = vrsqrt.pop %v874
        %v979 = vmul.f32 %v978, %v874
        %v980 = vmul.f32 %v979, %v978
        %v981 = vmul.f32 0.5, %v980
        %v982 = vsub.f32 1.5, %v981
        %v983 = vmul.f32 %v978, %v982
        %v984 = vmul.f32 %v874, %v983
        %vm985 = vcmp.eq.f32.partialorder %v874, inf
        %v986 = vsel %vm985, %v874, %v984
        %vm987 = vcmp.eq.f32.partialorder %v874, 0.0
        %v988 = vand.u32 %v874, 2147483648
        %v989 = vsel %vm987, %v988, %v986
        %v990 = vrsqrt.pop %v875
        %v991 = vmul.f32 %v990, %v875
        %v992 = vmul.f32 %v991, %v990
        %v993 = vmul.f32 0.5, %v992
        %v994 = vsub.f32 1.5, %v993
        %v995 = vmul.f32 %v990, %v994
        %v996 = vmul.f32 %v875, %v995
        %vm997 = vcmp.eq.f32.partialorder %v875, inf
        %v998 = vsel %vm997, %v875, %v996
        %vm999 = vcmp.eq.f32.partialorder %v875, 0.0
        %v1000 = vand.u32 %v875, 2147483648
        %v1001 = vsel %vm999, %v1000, %v998
        %v1002 = vrsqrt.pop %v876
        %v1003 = vmul.f32 %v1002, %v876
        %v1004 = vmul.f32 %v1003, %v1002
        %v1005 = vmul.f32 0.5, %v1004
        %v1006 = vsub.f32 1.5, %v1005
        %v1007 = vmul.f32 %v1002, %v1006
        %v1008 = vmul.f32 %v876, %v1007
        %vm1009 = vcmp.eq.f32.partialorder %v876, inf
        %v1010 = vsel %vm1009, %v876, %v1008
        %vm1011 = vcmp.eq.f32.partialorder %v876, 0.0
        %v1012 = vand.u32 %v876, 2147483648
        %v1013 = vsel %vm1011, %v1012, %v1010
        %v1014 = vrsqrt.pop %v877
        %v1015 = vmul.f32 %v1014, %v877
        %v1016 = vmul.f32 %v1015, %v1014
        %v1017 = vmul.f32 0.5, %v1016
        %v1018 = vsub.f32 1.5, %v1017
        %v1019 = vmul.f32 %v1014, %v1018
        %v1020 = vmul.f32 %v877, %v1019
        %vm1021 = vcmp.eq.f32.partialorder %v877, inf
        %v1022 = vsel %vm1021, %v877, %v1020
        %vm1023 = vcmp.eq.f32.partialorder %v877, 0.0
        %v1024 = vand.u32 %v877, 2147483648
        %v1025 = vsel %vm1023, %v1024, %v1022
        %v1026 = vrsqrt.pop %v878
        %v1027 = vmul.f32 %v1026, %v878
        %v1028 = vmul.f32 %v1027, %v1026
        %v1029 = vmul.f32 0.5, %v1028
        %v1030 = vsub.f32 1.5, %v1029
        %v1031 = vmul.f32 %v1026, %v1030
        %v1032 = vmul.f32 %v878, %v1031
        %vm1033 = vcmp.eq.f32.partialorder %v878, inf
        %v1034 = vsel %vm1033, %v878, %v1032
        %vm1035 = vcmp.eq.f32.partialorder %v878, 0.0
        %v1036 = vand.u32 %v878, 2147483648
        %v1037 = vsel %vm1035, %v1036, %v1034
        %v1038 = vrsqrt.pop %v879
        %v1039 = vmul.f32 %v1038, %v879
        %v1040 = vmul.f32 %v1039, %v1038
        %v1041 = vmul.f32 0.5, %v1040
        %v1042 = vsub.f32 1.5, %v1041
        %v1043 = vmul.f32 %v1038, %v1042
        %v1044 = vmul.f32 %v879, %v1043
        %vm1045 = vcmp.eq.f32.partialorder %v879, inf
        %v1046 = vsel %vm1045, %v879, %v1044
        %vm1047 = vcmp.eq.f32.partialorder %v879, 0.0
        %v1048 = vand.u32 %v879, 2147483648
        %v1049 = vsel %vm1047, %v1048, %v1046
        %v1050 = vrsqrt.pop %v880
        %v1051 = vmul.f32 %v1050, %v880
        %v1052 = vmul.f32 %v1051, %v1050
        %v1053 = vmul.f32 0.5, %v1052
        %v1054 = vsub.f32 1.5, %v1053
        %v1055 = vmul.f32 %v1050, %v1054
        %v1056 = vmul.f32 %v880, %v1055
        %vm1057 = vcmp.eq.f32.partialorder %v880, inf
        %v1058 = vsel %vm1057, %v880, %v1056
        %vm1059 = vcmp.eq.f32.partialorder %v880, 0.0
        %v1060 = vand.u32 %v880, 2147483648
        %v1061 = vsel %vm1059, %v1060, %v1058
        %v1062 = vrsqrt.pop %v881
        %v1063 = vmul.f32 %v1062, %v881
        %v1064 = vmul.f32 %v1063, %v1062
        %v1065 = vmul.f32 0.5, %v1064
        %v1066 = vsub.f32 1.5, %v1065
        %v1067 = vmul.f32 %v1062, %v1066
        %v1068 = vmul.f32 %v881, %v1067
        %vm1069 = vcmp.eq.f32.partialorder %v881, inf
        %v1070 = vsel %vm1069, %v881, %v1068
        %vm1071 = vcmp.eq.f32.partialorder %v881, 0.0
        %v1072 = vand.u32 %v881, 2147483648
        %v1073 = vsel %vm1071, %v1072, %v1070
        %v1074 = vadd.f32 %v893, 0.001
        %v1075 = vadd.f32 %v905, 0.001
        %v1076 = vadd.f32 %v917, 0.001
        %v1077 = vadd.f32 %v929, 0.001
        %v1078 = vadd.f32 %v941, 0.001
        %v1079 = vadd.f32 %v953, 0.001
        %v1080 = vadd.f32 %v965, 0.001
        %v1081 = vadd.f32 %v977, 0.001
        %v1082 = vadd.f32 %v989, 0.001
        %v1083 = vadd.f32 %v1001, 0.001
        %v1084 = vadd.f32 %v1013, 0.001
        %v1085 = vadd.f32 %v1025, 0.001
        %v1086 = vadd.f32 %v1037, 0.001
        %v1087 = vadd.f32 %v1049, 0.001
        %v1088 = vadd.f32 %v1061, 0.001
        %v1089 = vadd.f32 %v1073, 0.001
        %v1090 = vrcp.pop %v1074
        %v1091 = vmul.f32 %v1074, %v1090
        %v1092 = vsub.f32 1.0, %v1091
        %v1093 = vmul.f32 %v1090, %v1092
        %v1094 = vadd.f32 %v1090, %v1093
        %vm1095 = vweird.f32 %v1074
        %vm1096 = vweird.f32 %v1090
        %vm1097 = vmor %vm1095, %vm1096
        %v1098 = vsel %vm1097, %v1090, %v1094
        %v1099 = vand.u32 2147483647, %v1074
        %vm1100 = vcmp.eq.f32.partialorder %v1099, 8.507059e+37
        %v1101 = vand.u32 %v1074, 2147483648
        %v1102 = vor.u32 1.1754944e-38, %v1101
        %v1103 = vsel %vm1100, %v1102, %v1098
        %v1104 = vrcp.pop %v1075
        %v1105 = vmul.f32 %v1075, %v1104
        %v1106 = vsub.f32 1.0, %v1105
        %v1107 = vmul.f32 %v1104, %v1106
        %v1108 = vadd.f32 %v1104, %v1107
        %vm1109 = vweird.f32 %v1075
        %vm1110 = vweird.f32 %v1104
        %vm1111 = vmor %vm1109, %vm1110
        %v1112 = vsel %vm1111, %v1104, %v1108
        %v1113 = vand.u32 2147483647, %v1075
        %vm1114 = vcmp.eq.f32.partialorder %v1113, 8.507059e+37
        %v1115 = vand.u32 %v1075, 2147483648
        %v1116 = vor.u32 1.1754944e-38, %v1115
        %v1117 = vsel %vm1114, %v1116, %v1112
        %v1118 = vrcp.pop %v1076
        %v1119 = vmul.f32 %v1076, %v1118
        %v1120 = vsub.f32 1.0, %v1119
        %v1121 = vmul.f32 %v1118, %v1120
        %v1122 = vadd.f32 %v1118, %v1121
        %vm1123 = vweird.f32 %v1076
        %vm1124 = vweird.f32 %v1118
        %vm1125 = vmor %vm1123, %vm1124
        %v1126 = vsel %vm1125, %v1118, %v1122
        %v1127 = vand.u32 2147483647, %v1076
        %vm1128 = vcmp.eq.f32.partialorder %v1127, 8.507059e+37
        %v1129 = vand.u32 %v1076, 2147483648
        %v1130 = vor.u32 1.1754944e-38, %v1129
        %v1131 = vsel %vm1128, %v1130, %v1126
        %v1132 = vrcp.pop %v1077
        %v1133 = vmul.f32 %v1077, %v1132
        %v1134 = vsub.f32 1.0, %v1133
        %v1135 = vmul.f32 %v1132, %v1134
        %v1136 = vadd.f32 %v1132, %v1135
        %vm1137 = vweird.f32 %v1077
        %vm1138 = vweird.f32 %v1132
        %vm1139 = vmor %vm1137, %vm1138
        %v1140 = vsel %vm1139, %v1132, %v1136
        %v1141 = vand.u32 2147483647, %v1077
        %vm1142 = vcmp.eq.f32.partialorder %v1141, 8.507059e+37
        %v1143 = vand.u32 %v1077, 2147483648
        %v1144 = vor.u32 1.1754944e-38, %v1143
        %v1145 = vsel %vm1142, %v1144, %v1140
        %v1146 = vrcp.pop %v1078
        %v1147 = vmul.f32 %v1078, %v1146
        %v1148 = vsub.f32 1.0, %v1147
        %v1149 = vmul.f32 %v1146, %v1148
        %v1150 = vadd.f32 %v1146, %v1149
        %vm1151 = vweird.f32 %v1078
        %vm1152 = vweird.f32 %v1146
        %vm1153 = vmor %vm1151, %vm1152
        %v1154 = vsel %vm1153, %v1146, %v1150
        %v1155 = vand.u32 2147483647, %v1078
        %vm1156 = vcmp.eq.f32.partialorder %v1155, 8.507059e+37
        %v1157 = vand.u32 %v1078, 2147483648
        %v1158 = vor.u32 1.1754944e-38, %v1157
        %v1159 = vsel %vm1156, %v1158, %v1154
        %v1160 = vrcp.pop %v1079
        %v1161 = vmul.f32 %v1079, %v1160
        %v1162 = vsub.f32 1.0, %v1161
        %v1163 = vmul.f32 %v1160, %v1162
        %v1164 = vadd.f32 %v1160, %v1163
        %vm1165 = vweird.f32 %v1079
        %vm1166 = vweird.f32 %v1160
        %vm1167 = vmor %vm1165, %vm1166
        %v1168 = vsel %vm1167, %v1160, %v1164
        %v1169 = vand.u32 2147483647, %v1079
        %vm1170 = vcmp.eq.f32.partialorder %v1169, 8.507059e+37
        %v1171 = vand.u32 %v1079, 2147483648
        %v1172 = vor.u32 1.1754944e-38, %v1171
        %v1173 = vsel %vm1170, %v1172, %v1168
        %v1174 = vrcp.pop %v1080
        %v1175 = vmul.f32 %v1080, %v1174
        %v1176 = vsub.f32 1.0, %v1175
        %v1177 = vmul.f32 %v1174, %v1176
        %v1178 = vadd.f32 %v1174, %v1177
        %vm1179 = vweird.f32 %v1080
        %vm1180 = vweird.f32 %v1174
        %vm1181 = vmor %vm1179, %vm1180
        %v1182 = vsel %vm1181, %v1174, %v1178
        %v1183 = vand.u32 2147483647, %v1080
        %vm1184 = vcmp.eq.f32.partialorder %v1183, 8.507059e+37
        %v1185 = vand.u32 %v1080, 2147483648
        %v1186 = vor.u32 1.1754944e-38, %v1185
        %v1187 = vsel %vm1184, %v1186, %v1182
        %v1188 = vrcp.pop %v1081
        %v1189 = vmul.f32 %v1081, %v1188
        %v1190 = vsub.f32 1.0, %v1189
        %v1191 = vmul.f32 %v1188, %v1190
        %v1192 = vadd.f32 %v1188, %v1191
        %vm1193 = vweird.f32 %v1081
        %vm1194 = vweird.f32 %v1188
        %vm1195 = vmor %vm1193, %vm1194
        %v1196 = vsel %vm1195, %v1188, %v1192
        %v1197 = vand.u32 2147483647, %v1081
        %vm1198 = vcmp.eq.f32.partialorder %v1197, 8.507059e+37
        %v1199 = vand.u32 %v1081, 2147483648
        %v1200 = vor.u32 1.1754944e-38, %v1199
        %v1201 = vsel %vm1198, %v1200, %v1196
        %v1202 = vrcp.pop %v1082
        %v1203 = vmul.f32 %v1082, %v1202
        %v1204 = vsub.f32 1.0, %v1203
        %v1205 = vmul.f32 %v1202, %v1204
        %v1206 = vadd.f32 %v1202, %v1205
        %vm1207 = vweird.f32 %v1082
        %vm1208 = vweird.f32 %v1202
        %vm1209 = vmor %vm1207, %vm1208
        %v1210 = vsel %vm1209, %v1202, %v1206
        %v1211 = vand.u32 2147483647, %v1082
        %vm1212 = vcmp.eq.f32.partialorder %v1211, 8.507059e+37
        %v1213 = vand.u32 %v1082, 2147483648
        %v1214 = vor.u32 1.1754944e-38, %v1213
        %v1215 = vsel %vm1212, %v1214, %v1210
        %v1216 = vrcp.pop %v1083
        %v1217 = vmul.f32 %v1083, %v1216
        %v1218 = vsub.f32 1.0, %v1217
        %v1219 = vmul.f32 %v1216, %v1218
        %v1220 = vadd.f32 %v1216, %v1219
        %vm1221 = vweird.f32 %v1083
        %vm1222 = vweird.f32 %v1216
        %vm1223 = vmor %vm1221, %vm1222
        %v1224 = vsel %vm1223, %v1216, %v1220
        %v1225 = vand.u32 2147483647, %v1083
        %vm1226 = vcmp.eq.f32.partialorder %v1225, 8.507059e+37
        %v1227 = vand.u32 %v1083, 2147483648
        %v1228 = vor.u32 1.1754944e-38, %v1227
        %v1229 = vsel %vm1226, %v1228, %v1224
        %v1230 = vrcp.pop %v1084
        %v1231 = vmul.f32 %v1084, %v1230
        %v1232 = vsub.f32 1.0, %v1231
        %v1233 = vmul.f32 %v1230, %v1232
        %v1234 = vadd.f32 %v1230, %v1233
        %vm1235 = vweird.f32 %v1084
        %vm1236 = vweird.f32 %v1230
        %vm1237 = vmor %vm1235, %vm1236
        %v1238 = vsel %vm1237, %v1230, %v1234
        %v1239 = vand.u32 2147483647, %v1084
        %vm1240 = vcmp.eq.f32.partialorder %v1239, 8.507059e+37
        %v1241 = vand.u32 %v1084, 2147483648
        %v1242 = vor.u32 1.1754944e-38, %v1241
        %v1243 = vsel %vm1240, %v1242, %v1238
        %v1244 = vrcp.pop %v1085
        %v1245 = vmul.f32 %v1085, %v1244
        %v1246 = vsub.f32 1.0, %v1245
        %v1247 = vmul.f32 %v1244, %v1246
        %v1248 = vadd.f32 %v1244, %v1247
        %vm1249 = vweird.f32 %v1085
        %vm1250 = vweird.f32 %v1244
        %vm1251 = vmor %vm1249, %vm1250
        %v1252 = vsel %vm1251, %v1244, %v1248
        %v1253 = vand.u32 2147483647, %v1085
        %vm1254 = vcmp.eq.f32.partialorder %v1253, 8.507059e+37
        %v1255 = vand.u32 %v1085, 2147483648
        %v1256 = vor.u32 1.1754944e-38, %v1255
        %v1257 = vsel %vm1254, %v1256, %v1252
        %v1258 = vrcp.pop %v1086
        %v1259 = vmul.f32 %v1086, %v1258
        %v1260 = vsub.f32 1.0, %v1259
        %v1261 = vmul.f32 %v1258, %v1260
        %v1262 = vadd.f32 %v1258, %v1261
        %vm1263 = vweird.f32 %v1086
        %vm1264 = vweird.f32 %v1258
        %vm1265 = vmor %vm1263, %vm1264
        %v1266 = vsel %vm1265, %v1258, %v1262
        %v1267 = vand.u32 2147483647, %v1086
        %vm1268 = vcmp.eq.f32.partialorder %v1267, 8.507059e+37
        %v1269 = vand.u32 %v1086, 2147483648
        %v1270 = vor.u32 1.1754944e-38, %v1269
        %v1271 = vsel %vm1268, %v1270, %v1266
        %v1272 = vrcp.pop %v1087
        %v1273 = vmul.f32 %v1087, %v1272
        %v1274 = vsub.f32 1.0, %v1273
        %v1275 = vmul.f32 %v1272, %v1274
        %v1276 = vadd.f32 %v1272, %v1275
        %vm1277 = vweird.f32 %v1087
        %vm1278 = vweird.f32 %v1272
        %vm1279 = vmor %vm1277, %vm1278
        %v1280 = vsel %vm1279, %v1272, %v1276
        %v1281 = vand.u32 2147483647, %v1087
        %vm1282 = vcmp.eq.f32.partialorder %v1281, 8.507059e+37
        %v1283 = vand.u32 %v1087, 2147483648
        %v1284 = vor.u32 1.1754944e-38, %v1283
        %v1285 = vsel %vm1282, %v1284, %v1280
        %v1286 = vrcp.pop %v1088
        %v1287 = vmul.f32 %v1088, %v1286
        %v1288 = vsub.f32 1.0, %v1287
        %v1289 = vmul.f32 %v1286, %v1288
        %v1290 = vadd.f32 %v1286, %v1289
        %vm1291 = vweird.f32 %v1088
        %vm1292 = vweird.f32 %v1286
        %vm1293 = vmor %vm1291, %vm1292
        %v1294 = vsel %vm1293, %v1286, %v1290
        %v1295 = vand.u32 2147483647, %v1088
        %vm1296 = vcmp.eq.f32.partialorder %v1295, 8.507059e+37
        %v1297 = vand.u32 %v1088, 2147483648
        %v1298 = vor.u32 1.1754944e-38, %v1297
        %v1299 = vsel %vm1296, %v1298, %v1294
        %v1300 = vrcp.pop %v1089
        %v1301 = vmul.f32 %v1089, %v1300
        %v1302 = vsub.f32 1.0, %v1301
        %v1303 = vmul.f32 %v1300, %v1302
        %v1304 = vadd.f32 %v1300, %v1303
        %vm1305 = vweird.f32 %v1089
        %vm1306 = vweird.f32 %v1300
        %vm1307 = vmor %vm1305, %vm1306
        %v1308 = vsel %vm1307, %v1300, %v1304
        %v1309 = vand.u32 2147483647, %v1089
        %vm1310 = vcmp.eq.f32.partialorder %v1309, 8.507059e+37
        %v1311 = vand.u32 %v1089, 2147483648
        %v1312 = vor.u32 1.1754944e-38, %v1311
        %v1313 = vsel %vm1310, %v1312, %v1308
        %v1314 = vmul.f32 %v802, %v1103
        %v1315 = vmul.f32 %v803, %v1117
        %v1316 = vmul.f32 %v804, %v1131
        %v1317 = vmul.f32 %v805, %v1145
        %v1318 = vmul.f32 %v806, %v1159
        %v1319 = vmul.f32 %v807, %v1173
        %v1320 = vmul.f32 %v808, %v1187
        %v1321 = vmul.f32 %v809, %v1201
        %v1322 = vmul.f32 %v810, %v1215
        %v1323 = vmul.f32 %v811, %v1229
        %v1324 = vmul.f32 %v812, %v1243
        %v1325 = vmul.f32 %v813, %v1257
        %v1326 = vmul.f32 %v814, %v1271
        %v1327 = vmul.f32 %v815, %v1285
        %v1328 = vmul.f32 %v816, %v1299
        %v1329 = vmul.f32 %v817, %v1313
        %v1330 = vld [vmem:[%s5] sm:$0x1]
        %v1332 = vperm.slane %v1330, 0
        %v1334 = vmul.f32 %v1314, %v1332
        %v1335 = vmul.f32 %v1315, %v1332
        %v1336 = vmul.f32 %v1316, %v1332
        %v1337 = vmul.f32 %v1317, %v1332
        %v1338 = vmul.f32 %v1318, %v1332
        %v1339 = vmul.f32 %v1319, %v1332
        %v1340 = vmul.f32 %v1320, %v1332
        %v1341 = vmul.f32 %v1321, %v1332
        %v1342 = vmul.f32 %v1322, %v1332
        %v1343 = vmul.f32 %v1323, %v1332
        %v1344 = vmul.f32 %v1324, %v1332
        %v1345 = vmul.f32 %v1325, %v1332
        %v1346 = vmul.f32 %v1326, %v1332
        %v1347 = vmul.f32 %v1327, %v1332
        %v1348 = vmul.f32 %v1328, %v1332
        %v1349 = vmul.f32 %v1329, %v1332
        %v1350 = vld [vmem:[%s6] sm:$0x1]
        %v1352 = vperm.slane %v1350, 0
        %v1354 = vadd.f32 %v1334, %v1352
        %v1355 = vadd.f32 %v1335, %v1352
        %v1356 = vadd.f32 %v1336, %v1352
        %v1357 = vadd.f32 %v1337, %v1352
        %v1358 = vadd.f32 %v1338, %v1352
        %v1359 = vadd.f32 %v1339, %v1352
        %v1360 = vadd.f32 %v1340, %v1352
        %v1361 = vadd.f32 %v1341, %v1352
        %v1362 = vadd.f32 %v1342, %v1352
        %v1363 = vadd.f32 %v1343, %v1352
        %v1364 = vadd.f32 %v1344, %v1352
        %v1365 = vadd.f32 %v1345, %v1352
        %v1366 = vadd.f32 %v1346, %v1352
        %v1367 = vadd.f32 %v1347, %v1352
        %v1368 = vadd.f32 %v1348, %v1352
        %v1369 = vadd.f32 %v1349, %v1352
        %1370 = vst [vmem:[%s346] sm:$0xff] %v1354
        %1371 = vst [vmem:[%s346 + $0x8] sm:$0xff] %v1355
        %1372 = vst [vmem:[%s346 + $0x10] sm:$0xff] %v1356
        %1373 = vst [vmem:[%s346 + $0x18] sm:$0xff] %v1357
        %1374 = vst [vmem:[%s346 + $0x20] sm:$0xff] %v1358
        %1375 = vst [vmem:[%s346 + $0x28] sm:$0xff] %v1359
        %1376 = vst [vmem:[%s346 + $0x30] sm:$0xff] %v1360
        %1377 = vst [vmem:[%s346 + $0x38] sm:$0xff] %v1361
        %1378 = vst [vmem:[%s346 + $0x40] sm:$0xff] %v1362
        %1379 = vst [vmem:[%s346 + $0x48] sm:$0xff] %v1363
        %1380 = vst [vmem:[%s346 + $0x50] sm:$0xff] %v1364
        %1381 = vst [vmem:[%s346 + $0x58] sm:$0xff] %v1365
        %1382 = vst [vmem:[%s346 + $0x60] sm:$0xff] %v1366
        %1383 = vst [vmem:[%s346 + $0x68] sm:$0xff] %v1367
        %1384 = vst [vmem:[%s346 + $0x70] sm:$0xff] %v1368
        %1385 = vst [vmem:[%s346 + $0x78] sm:$0xff] %v1369
        %s1386 = sand.u32 %s186, 1
        %s1387 = scalar_lea.sflag [#allocation4], %s1386
        %s1388 = sand.u32 %s186, 1
        %s1389 = smul.addr %s1388, 128
        %s1390 = scalar_lea.vmem [#allocation10], %s1389
        // Predicated region
        $region65: #{tpu_custom_call.1} parent=47 // pred_check
          %p1391 = pneg %p196
        $region66: #{tpu_custom_call.1} parent=47 // pred_check_branch
          %1393 = sbr.rel (%p1391) target = $region68
        $region67: #{tpu_custom_call.1} parent=47 // pred_region
          %s1394 = smul.u32 16, %s26
          %1396 = vsyncadd %s1387, 0
          %s1397 = smul.addr %s1394, 8
          %s1398 = scalar_lea.hbm %s7, %s1397
          %s1399 = sshll.u32 %s1390, 4
          %s1400 = int_to_ptr.vmem [resolvable:$true] %s1399
          %s1401 = sshll.u32 %s1398, 4
          %s1402 = int_to_ptr.hbm [resolvable:$true] %s1401
          %1407 = dma.vmem_to_hbm [thread:$0]  %s1400, 2048, %s1402, %s1387, 128, 128, 8
        $region68: #{tpu_custom_call.1} parent=47 // pred_fallthru
          _
      $region48: #{tpu_custom_call.1} parent=5 // pred_fallthru
        _
      %p1408 = scmp.le.s32.totalorder 2, %s21
      // Predicated region
      $region69: #{tpu_custom_call.1} parent=5 // pred_check
        %p1409 = pneg %p1408
      $region70: #{tpu_custom_call.1} parent=5 // pred_check_branch
        %1411 = sbr.rel (%p1409) target = $region72
      $region71: #{tpu_custom_call.1} parent=5 // pred_region
        %s1412 = ssub.s32 %s21, 2
        // Predicated region
        $region73: #{tpu_custom_call.1} parent=71 // pred_check
          %p1413 = pneg %p202
        $region74: #{tpu_custom_call.1} parent=71 // pred_check_branch
          %1415 = sbr.rel (%p1413) target = $region76
        $region75: #{tpu_custom_call.1} parent=71 // pred_region
          %s1416 = sand.u32 %s187, 1
          %s1417 = scalar_lea.sflag [#allocation4], %s1416
          %s1418 = sand.u32 %s187, 1
          %s1419 = smul.addr %s1418, 128
          %s1420 = scalar_lea.vmem [#allocation10], %s1419
          %1422 = dma.done %s1417, 2048
        $region76: #{tpu_custom_call.1} parent=71 // pred_fallthru
          _
      $region72: #{tpu_custom_call.1} parent=5 // pred_fallthru
        _
    $region6: #{tpu_custom_call.1} parent=1 // loop_footer
      %s25 = sadd.s32 1, %s21
    $region7: #{tpu_custom_call.1} parent=1 // loop_footer_branch
      %20 = sbr.rel target = $region3
    $region8: #{tpu_custom_call.1} parent=1 // loop_exit
      _
    %1423 = vsyncpa [#allocation3], 1
    %s1424 = scalar_lea.sflag [#allocation3], 1
    %1425 = vsyncpa %s1424, 1
    %1426 = vsyncpa [#allocation6], 1
    %1427 = vsyncpa [#allocation9], 1
    %1428 = vsyncpa [#allocation4], 1
    %s1429 = scalar_lea.sflag [#allocation4], 1
    %1430 = vsyncpa %s1429, 1

</llo_original>
